<compile_context>
chip_gen: v6e
topology: v6e:2x2x1
jax: 0.10.0
libtpu: 0.0.40
codegen_flags: <defaults>
</compile_context>

<pallas_src>
import functools

import jax
import jax.numpy as jnp
from jax.experimental import pallas as pl
from jax.experimental.pallas import tpu as pltpu

DILATIONS = (1, 2, 3, 4)
MAX_PAD = 4          # max dilation == spatial halo width
LANE_MARGIN = 32     # extra zeros on each end of the flattened axis (>= MAX_PAD)
_NTAPS = 9           # 3x3 kernel


def _parallel_dilated_kernel(x_ref, w_ref, o_ref, patch_ref, *, H, W, Cin_pad):
    # x_ref:     (1, Cin_pad, flat_len)  zero-haloed, channel-padded, flattened input;
    #                                    channel index Cin (first pad channel) is all-ones
    #                                    and carries the bias through the matmul.
    # w_ref:     (4*Cout, K)             block-diagonal fused weight, K = 4*9*Cin_pad.
    # o_ref:     (1, Cout, ncols)        lane-dense output block.
    # patch_ref: (K, ncols)              VMEM im2col scratch for all 4 dilations.
    nd = len(DILATIONS)
    Cout = o_ref.shape[1]
    Wp = W + 2 * MAX_PAD
    ncols = H * Wp                       # output columns computed per image
    base = LANE_MARGIN + MAX_PAD * Wp    # flat index of output column 0

    # Combined im2col: 4 dilations x 9 taps.  The spatial zero halo turns every tap
    # into a pure static contiguous slice (no masks, no rolls); Cin_pad = 8 makes every
    # store a full sublane-aligned (8, ncols) tile.
    for d_idx, d in enumerate(DILATIONS):
        for kh in range(3):
            for kw in range(3):
                off = d * (kh - 1) * Wp + d * (kw - 1)
                row = (d_idx * _NTAPS + kh * 3 + kw) * Cin_pad
                patch_ref[row:row + Cin_pad, :] = (
                    x_ref[0, :, base + off: base + off + ncols])

    # ONE block-diagonal MXU matmul for all four branches (bias folded into K):
    # (4*Cout, K) @ (K, ncols) -> (4*Cout, ncols), f32 accumulation.
    z = jnp.dot(w_ref[...], patch_ref[...], preferred_element_type=jnp.float32)

    # ELU(alpha=1) on all four branches at once; clamp keeps the unselected branch finite.
    z = jnp.where(z > 0.0, z, jnp.exp(jnp.minimum(z, 0.0)) - 1.0)

    # Sum the four branch row-groups in vregs; single lane-dense store to the output.
    acc = z[0:Cout, :]
    for g in range(1, nd):
        acc = acc + z[g * Cout:(g + 1) * Cout, :]
    o_ref[0] = acc


def parallel_dilated_conv(x_nchw, weights, biases):
    """x_nchw : (B, Cin, H, W) f32
       weights: (4, 3, 3, Cin, Cout) f32 (HWIO per dilation branch)
       biases : (4, Cout) f32
       returns: (B, Cout, H, W) f32 (NCHW, matching the PyTorch module)."""
    B, Cin, H, W = x_nchw.shape
    nd = len(DILATIONS)
    assert weights.shape[:4] == (nd, 3, 3, Cin)
    Cout = weights.shape[-1]

    Hp, Wp = H + 2 * MAX_PAD, W + 2 * MAX_PAD
    ncols = H * Wp
    flat_len = LANE_MARGIN + Hp * Wp + LANE_MARGIN

    # Pad channels to a multiple of 8 with at least one spare channel: sublane-aligned
    # im2col tap stores + an all-ones channel to carry the bias through the matmul.
    Cin_pad = ((Cin + 1 + 7) // 8) * 8
    ones_ch = Cin
    K = nd * _NTAPS * Cin_pad            # fused contraction depth (288 at Cin=4)

    # Every tap offset must stay inside the flat margin (OOB VMEM reads are unchecked).
    base = LANE_MARGIN + MAX_PAD * Wp
    max_off = MAX_PAD * Wp + MAX_PAD
    assert base - max_off >= 0, "LANE_MARGIN too small for MAX_PAD"
    assert base + max_off + ncols <= flat_len, "flat margin too small"

    # Zero-pad spatial halo + channels, flatten H,W onto the lane axis, add the flat
    # margin, and set the spare channel to 1.0 (bias carrier).
    x_pad = jnp.pad(
        x_nchw, ((0, 0), (0, Cin_pad - Cin), (MAX_PAD, MAX_PAD), (MAX_PAD, MAX_PAD)))
    x_flat = jnp.pad(x_pad.reshape(B, Cin_pad, Hp * Wp),
                     ((0, 0), (0, 0), (LANE_MARGIN, LANE_MARGIN)))
    x_flat = x_flat.at[:, ones_ch, :].set(1.0)

    # Fused block-diagonal weight (4*Cout, K): branch d occupies rows [d*Cout,(d+1)*Cout)
    # and cols [d*9*Cin_pad, (d+1)*9*Cin_pad); K index = (d*9 + kh*3 + kw)*Cin_pad + cin;
    # the bias sits in the centre tap's ones-channel column.
    w_b = jnp.zeros((nd, Cout, _NTAPS, Cin_pad), jnp.float32)
    w_b = w_b.at[:, :, :, :Cin].set(
        jnp.transpose(weights, (0, 4, 1, 2, 3)).reshape(nd, Cout, _NTAPS, Cin))
    w_b = w_b.at[:, :, 4, ones_ch].set(biases)           # centre tap (kh=kw=1)
    w_b = w_b.reshape(nd, Cout, _NTAPS * Cin_pad)
    eye = jnp.eye(nd, dtype=jnp.float32)
    w_fused = (eye[:, None, :, None] * w_b[:, :, None, :]).reshape(nd * Cout, K)

    kernel = functools.partial(_parallel_dilated_kernel, H=H, W=W, Cin_pad=Cin_pad)

    out_flat = pl.pallas_call(
        kernel,
        out_shape=jax.ShapeDtypeStruct((B, Cout, ncols), jnp.float32),
        grid_spec=pltpu.PrefetchScalarGridSpec(
            num_scalar_prefetch=0,
            grid=(B,),
            in_specs=[
                pl.BlockSpec((1, Cin_pad, flat_len), lambda n: (n, 0, 0)),
                pl.BlockSpec((nd * Cout, K), lambda n: (0, 0)),
            ],
            out_specs=pl.BlockSpec((1, Cout, ncols), lambda n: (n, 0, 0)),
            scratch_shapes=[pltpu.VMEM((K, ncols), jnp.float32)],
        ),
        compiler_params=pltpu.CompilerParams(
            dimension_semantics=("parallel",),            # batch axis is independent
            vmem_limit_bytes=32 * 1024 * 1024,            # <1 MiB used; fits v7x scoped budget
        ),
    )(x_flat, w_fused)

    # Columns enumerate (h, w_padded) over the W-padded rows; drop the W halo -> NCHW.
    return out_flat.reshape(B, Cout, H, Wp)[:, :, :, MAX_PAD:MAX_PAD + W]


def _reference(x_nchw, weights, biases):
    """Pure-JAX reference (lax.conv_general_dilated) for verification."""
    x_nhwc = jnp.transpose(x_nchw, (0, 2, 3, 1))
    total = None
    for d_idx, d in enumerate(DILATIONS):
        out = jax.lax.conv_general_dilated(
            x_nhwc, weights[d_idx],
            window_strides=(1, 1),
            padding=((d, d), (d, d)),
            rhs_dilation=(d, d),
            dimension_numbers=('NHWC', 'HWIO', 'NHWC'),
            precision=jax.lax.Precision.HIGHEST,
        ) + biases[d_idx][None, None, None, :]
        branch = jnp.where(out > 0, out, jnp.expm1(out))   # ELU, alpha = 1
        total = branch if total is None else total + branch
    return jnp.transpose(total, (0, 3, 1, 2))


if __name__ == "__main__":
    B, Cin, Cout, H, W = 2, 4, 8, 16, 16

    key = jax.random.PRNGKey(0)
    key_x, key_w, key_b = jax.random.split(key, 3)

    x = jax.random.normal(key_x, (B, Cin, H, W), dtype=jnp.float32)
    # Deterministic param init (kaiming-uniform-like scale), HWIO per branch.
    fan_in = Cin * 3 * 3
    bound = 1.0 / (fan_in ** 0.5)
    weights = jax.random.uniform(key_w, (4, 3, 3, Cin, Cout),
                                 minval=-bound, maxval=bound, dtype=jnp.float32)
    biases = jax.random.uniform(key_b, (4, Cout),
                                minval=-bound, maxval=bound, dtype=jnp.float32)

    fwd = jax.jit(parallel_dilated_conv)
    out = jax.block_until_ready(fwd(x, weights, biases))

    ref = jax.block_until_ready(_reference(x, weights, biases))
    assert out.shape == (B, Cout, H, W)
    err = float(jnp.max(jnp.abs(out - ref)))
    assert jnp.allclose(out, ref, atol=1e-4, rtol=1e-4), err

    print("KERNEL_OK")
</pallas_src>

<mosaic_0001>
module attributes {stable_mosaic.version = 11 : i64} {
  func.func @_parallel_dilated_kernel(%arg0: i32, %arg1: memref<1x8x640xf32, #tpu.memory_space<vmem>>, %arg2: memref<32x288xf32, #tpu.memory_space<vmem>>, %arg3: memref<1x8x384xf32, #tpu.memory_space<vmem>>, %arg4: memref<288x384xf32, #tpu.memory_space<vmem>>) attributes {dimension_semantics = [#tpu.dimension_semantics<parallel>], iteration_bounds = array<i64: 2>, scalar_prefetch = 0 : i64, scratch_operands = 1 : i64, tpu.core_type = #tpu.core_type<tc>, window_params = [{transform_indices = @transform_0, window_bounds = array<i64: 1, 8, 640>}, {pipeline_mode = #tpu.pipeline_mode<synchronous>, transform_indices = @transform_1, window_bounds = array<i64: 32, 288>}, {transform_indices = @transform_2, window_bounds = array<i64: 1, 8, 384>}]} {
    %c0 = arith.constant 0 : index
    %c0_0 = arith.constant 0 : index
    %c103 = arith.constant 103 : index
    %0 = vector.load %arg1[%c0, %c0_0, %c103] : memref<1x8x640xf32, #tpu.memory_space<vmem>>, vector<1x8x384xf32>
    %1 = vector.shape_cast %0 : vector<1x8x384xf32> to vector<8x384xf32>
    %c0_1 = arith.constant 0 : index
    %c0_2 = arith.constant 0 : index
    %2 = vector.load %arg4[%c0_1, %c0_2] : memref<288x384xf32, #tpu.memory_space<vmem>>, vector<8x384xf32>
    tpu.vector_store %arg4[%c0_1, %c0_2], %1 {strides = array<i32>} : memref<288x384xf32, #tpu.memory_space<vmem>>, vector<8x384xf32>,
    %c0_3 = arith.constant 0 : index
    %c0_4 = arith.constant 0 : index
    %c104 = arith.constant 104 : index
    %3 = vector.load %arg1[%c0_3, %c0_4, %c104] : memref<1x8x640xf32, #tpu.memory_space<vmem>>, vector<1x8x384xf32>
    %4 = vector.shape_cast %3 : vector<1x8x384xf32> to vector<8x384xf32>
    %c8 = arith.constant 8 : index
    %c0_5 = arith.constant 0 : index
    %5 = vector.load %arg4[%c8, %c0_5] : memref<288x384xf32, #tpu.memory_space<vmem>>, vector<8x384xf32>
    tpu.vector_store %arg4[%c8, %c0_5], %4 {strides = array<i32>} : memref<288x384xf32, #tpu.memory_space<vmem>>, vector<8x384xf32>,
    %c0_6 = arith.constant 0 : index
    %c0_7 = arith.constant 0 : index
    %c105 = arith.constant 105 : index
    %6 = vector.load %arg1[%c0_6, %c0_7, %c105] : memref<1x8x640xf32, #tpu.memory_space<vmem>>, vector<1x8x384xf32>
    %7 = vector.shape_cast %6 : vector<1x8x384xf32> to vector<8x384xf32>
    %c16 = arith.constant 16 : index
    %c0_8 = arith.constant 0 : index
    %8 = vector.load %arg4[%c16, %c0_8] : memref<288x384xf32, #tpu.memory_space<vmem>>, vector<8x384xf32>
    tpu.vector_store %arg4[%c16, %c0_8], %7 {strides = array<i32>} : memref<288x384xf32, #tpu.memory_space<vmem>>, vector<8x384xf32>,
    %c0_9 = arith.constant 0 : index
    %c0_10 = arith.constant 0 : index
    %c127 = arith.constant 127 : index
    %9 = vector.load %arg1[%c0_9, %c0_10, %c127] : memref<1x8x640xf32, #tpu.memory_space<vmem>>, vector<1x8x384xf32>
    %10 = vector.shape_cast %9 : vector<1x8x384xf32> to vector<8x384xf32>
    %c24 = arith.constant 24 : index
    %c0_11 = arith.constant 0 : index
    %11 = vector.load %arg4[%c24, %c0_11] : memref<288x384xf32, #tpu.memory_space<vmem>>, vector<8x384xf32>
    tpu.vector_store %arg4[%c24, %c0_11], %10 {strides = array<i32>} : memref<288x384xf32, #tpu.memory_space<vmem>>, vector<8x384xf32>,
    %c0_12 = arith.constant 0 : index
    %c0_13 = arith.constant 0 : index
    %c128 = arith.constant 128 : index
    %12 = vector.load %arg1[%c0_12, %c0_13, %c128] : memref<1x8x640xf32, #tpu.memory_space<vmem>>, vector<1x8x384xf32>
    %13 = vector.shape_cast %12 : vector<1x8x384xf32> to vector<8x384xf32>
    %c32 = arith.constant 32 : index
    %c0_14 = arith.constant 0 : index
    %14 = vector.load %arg4[%c32, %c0_14] : memref<288x384xf32, #tpu.memory_space<vmem>>, vector<8x384xf32>
    tpu.vector_store %arg4[%c32, %c0_14], %13 {strides = array<i32>} : memref<288x384xf32, #tpu.memory_space<vmem>>, vector<8x384xf32>,
    %c0_15 = arith.constant 0 : index
    %c0_16 = arith.constant 0 : index
    %c129 = arith.constant 129 : index
    %15 = vector.load %arg1[%c0_15, %c0_16, %c129] : memref<1x8x640xf32, #tpu.memory_space<vmem>>, vector<1x8x384xf32>
    %16 = vector.shape_cast %15 : vector<1x8x384xf32> to vector<8x384xf32>
    %c40 = arith.constant 40 : index
    %c0_17 = arith.constant 0 : index
    %17 = vector.load %arg4[%c40, %c0_17] : memref<288x384xf32, #tpu.memory_space<vmem>>, vector<8x384xf32>
    tpu.vector_store %arg4[%c40, %c0_17], %16 {strides = array<i32>} : memref<288x384xf32, #tpu.memory_space<vmem>>, vector<8x384xf32>,
    %c0_18 = arith.constant 0 : index
    %c0_19 = arith.constant 0 : index
    %c151 = arith.constant 151 : index
    %18 = vector.load %arg1[%c0_18, %c0_19, %c151] : memref<1x8x640xf32, #tpu.memory_space<vmem>>, vector<1x8x384xf32>
    %19 = vector.shape_cast %18 : vector<1x8x384xf32> to vector<8x384xf32>
    %c48 = arith.constant 48 : index
    %c0_20 = arith.constant 0 : index
    %20 = vector.load %arg4[%c48, %c0_20] : memref<288x384xf32, #tpu.memory_space<vmem>>, vector<8x384xf32>
    tpu.vector_store %arg4[%c48, %c0_20], %19 {strides = array<i32>} : memref<288x384xf32, #tpu.memory_space<vmem>>, vector<8x384xf32>,
    %c0_21 = arith.constant 0 : index
    %c0_22 = arith.constant 0 : index
    %c152 = arith.constant 152 : index
    %21 = vector.load %arg1[%c0_21, %c0_22, %c152] : memref<1x8x640xf32, #tpu.memory_space<vmem>>, vector<1x8x384xf32>
    %22 = vector.shape_cast %21 : vector<1x8x384xf32> to vector<8x384xf32>
    %c56 = arith.constant 56 : index
    %c0_23 = arith.constant 0 : index
    %23 = vector.load %arg4[%c56, %c0_23] : memref<288x384xf32, #tpu.memory_space<vmem>>, vector<8x384xf32>
    tpu.vector_store %arg4[%c56, %c0_23], %22 {strides = array<i32>} : memref<288x384xf32, #tpu.memory_space<vmem>>, vector<8x384xf32>,
    %c0_24 = arith.constant 0 : index
    %c0_25 = arith.constant 0 : index
    %c153 = arith.constant 153 : index
    %24 = vector.load %arg1[%c0_24, %c0_25, %c153] : memref<1x8x640xf32, #tpu.memory_space<vmem>>, vector<1x8x384xf32>
    %25 = vector.shape_cast %24 : vector<1x8x384xf32> to vector<8x384xf32>
    %c64 = arith.constant 64 : index
    %c0_26 = arith.constant 0 : index
    %26 = vector.load %arg4[%c64, %c0_26] : memref<288x384xf32, #tpu.memory_space<vmem>>, vector<8x384xf32>
    tpu.vector_store %arg4[%c64, %c0_26], %25 {strides = array<i32>} : memref<288x384xf32, #tpu.memory_space<vmem>>, vector<8x384xf32>,
    %c0_27 = arith.constant 0 : index
    %c0_28 = arith.constant 0 : index
    %c78 = arith.constant 78 : index
    %27 = vector.load %arg1[%c0_27, %c0_28, %c78] : memref<1x8x640xf32, #tpu.memory_space<vmem>>, vector<1x8x384xf32>
    %28 = vector.shape_cast %27 : vector<1x8x384xf32> to vector<8x384xf32>
    %c72 = arith.constant 72 : index
    %c0_29 = arith.constant 0 : index
    %29 = vector.load %arg4[%c72, %c0_29] : memref<288x384xf32, #tpu.memory_space<vmem>>, vector<8x384xf32>
    tpu.vector_store %arg4[%c72, %c0_29], %28 {strides = array<i32>} : memref<288x384xf32, #tpu.memory_space<vmem>>, vector<8x384xf32>,
    %c0_30 = arith.constant 0 : index
    %c0_31 = arith.constant 0 : index
    %c80 = arith.constant 80 : index
    %30 = vector.load %arg1[%c0_30, %c0_31, %c80] : memref<1x8x640xf32, #tpu.memory_space<vmem>>, vector<1x8x384xf32>
    %31 = vector.shape_cast %30 : vector<1x8x384xf32> to vector<8x384xf32>
    %c80_32 = arith.constant 80 : index
    %c0_33 = arith.constant 0 : index
    %32 = vector.load %arg4[%c80_32, %c0_33] : memref<288x384xf32, #tpu.memory_space<vmem>>, vector<8x384xf32>
    tpu.vector_store %arg4[%c80_32, %c0_33], %31 {strides = array<i32>} : memref<288x384xf32, #tpu.memory_space<vmem>>, vector<8x384xf32>,
    %c0_34 = arith.constant 0 : index
    %c0_35 = arith.constant 0 : index
    %c82 = arith.constant 82 : index
    %33 = vector.load %arg1[%c0_34, %c0_35, %c82] : memref<1x8x640xf32, #tpu.memory_space<vmem>>, vector<1x8x384xf32>
    %34 = vector.shape_cast %33 : vector<1x8x384xf32> to vector<8x384xf32>
    %c88 = arith.constant 88 : index
    %c0_36 = arith.constant 0 : index
    %35 = vector.load %arg4[%c88, %c0_36] : memref<288x384xf32, #tpu.memory_space<vmem>>, vector<8x384xf32>
    tpu.vector_store %arg4[%c88, %c0_36], %34 {strides = array<i32>} : memref<288x384xf32, #tpu.memory_space<vmem>>, vector<8x384xf32>,
    %c0_37 = arith.constant 0 : index
    %c0_38 = arith.constant 0 : index
    %c126 = arith.constant 126 : index
    %36 = vector.load %arg1[%c0_37, %c0_38, %c126] : memref<1x8x640xf32, #tpu.memory_space<vmem>>, vector<1x8x384xf32>
    %37 = vector.shape_cast %36 : vector<1x8x384xf32> to vector<8x384xf32>
    %c96 = arith.constant 96 : index
    %c0_39 = arith.constant 0 : index
    %38 = vector.load %arg4[%c96, %c0_39] : memref<288x384xf32, #tpu.memory_space<vmem>>, vector<8x384xf32>
    tpu.vector_store %arg4[%c96, %c0_39], %37 {strides = array<i32>} : memref<288x384xf32, #tpu.memory_space<vmem>>, vector<8x384xf32>,
    %c0_40 = arith.constant 0 : index
    %c0_41 = arith.constant 0 : index
    %c128_42 = arith.constant 128 : index
    %39 = vector.load %arg1[%c0_40, %c0_41, %c128_42] : memref<1x8x640xf32, #tpu.memory_space<vmem>>, vector<1x8x384xf32>
    %40 = vector.shape_cast %39 : vector<1x8x384xf32> to vector<8x384xf32>
    %c104_43 = arith.constant 104 : index
    %c0_44 = arith.constant 0 : index
    %41 = vector.load %arg4[%c104_43, %c0_44] : memref<288x384xf32, #tpu.memory_space<vmem>>, vector<8x384xf32>
    tpu.vector_store %arg4[%c104_43, %c0_44], %40 {strides = array<i32>} : memref<288x384xf32, #tpu.memory_space<vmem>>, vector<8x384xf32>,
    %c0_45 = arith.constant 0 : index
    %c0_46 = arith.constant 0 : index
    %c130 = arith.constant 130 : index
    %42 = vector.load %arg1[%c0_45, %c0_46, %c130] : memref<1x8x640xf32, #tpu.memory_space<vmem>>, vector<1x8x384xf32>
    %43 = vector.shape_cast %42 : vector<1x8x384xf32> to vector<8x384xf32>
    %c112 = arith.constant 112 : index
    %c0_47 = arith.constant 0 : index
    %44 = vector.load %arg4[%c112, %c0_47] : memref<288x384xf32, #tpu.memory_space<vmem>>, vector<8x384xf32>
    tpu.vector_store %arg4[%c112, %c0_47], %43 {strides = array<i32>} : memref<288x384xf32, #tpu.memory_space<vmem>>, vector<8x384xf32>,
    %c0_48 = arith.constant 0 : index
    %c0_49 = arith.constant 0 : index
    %c174 = arith.constant 174 : index
    %45 = vector.load %arg1[%c0_48, %c0_49, %c174] : memref<1x8x640xf32, #tpu.memory_space<vmem>>, vector<1x8x384xf32>
    %46 = vector.shape_cast %45 : vector<1x8x384xf32> to vector<8x384xf32>
    %c120 = arith.constant 120 : index
    %c0_50 = arith.constant 0 : index
    %47 = vector.load %arg4[%c120, %c0_50] : memref<288x384xf32, #tpu.memory_space<vmem>>, vector<8x384xf32>
    tpu.vector_store %arg4[%c120, %c0_50], %46 {strides = array<i32>} : memref<288x384xf32, #tpu.memory_space<vmem>>, vector<8x384xf32>,
    %c0_51 = arith.constant 0 : index
    %c0_52 = arith.constant 0 : index
    %c176 = arith.constant 176 : index
    %48 = vector.load %arg1[%c0_51, %c0_52, %c176] : memref<1x8x640xf32, #tpu.memory_space<vmem>>, vector<1x8x384xf32>
    %49 = vector.shape_cast %48 : vector<1x8x384xf32> to vector<8x384xf32>
    %c128_53 = arith.constant 128 : index
    %c0_54 = arith.constant 0 : index
    %50 = vector.load %arg4[%c128_53, %c0_54] : memref<288x384xf32, #tpu.memory_space<vmem>>, vector<8x384xf32>
    tpu.vector_store %arg4[%c128_53, %c0_54], %49 {strides = array<i32>} : memref<288x384xf32, #tpu.memory_space<vmem>>, vector<8x384xf32>,
    %c0_55 = arith.constant 0 : index
    %c0_56 = arith.constant 0 : index
    %c178 = arith.constant 178 : index
    %51 = vector.load %arg1[%c0_55, %c0_56, %c178] : memref<1x8x640xf32, #tpu.memory_space<vmem>>, vector<1x8x384xf32>
    %52 = vector.shape_cast %51 : vector<1x8x384xf32> to vector<8x384xf32>
    %c136 = arith.constant 136 : index
    %c0_57 = arith.constant 0 : index
    %53 = vector.load %arg4[%c136, %c0_57] : memref<288x384xf32, #tpu.memory_space<vmem>>, vector<8x384xf32>
    tpu.vector_store %arg4[%c136, %c0_57], %52 {strides = array<i32>} : memref<288x384xf32, #tpu.memory_space<vmem>>, vector<8x384xf32>,
    %c0_58 = arith.constant 0 : index
    %c0_59 = arith.constant 0 : index
    %c53 = arith.constant 53 : index
    %54 = vector.load %arg1[%c0_58, %c0_59, %c53] : memref<1x8x640xf32, #tpu.memory_space<vmem>>, vector<1x8x384xf32>
    %55 = vector.shape_cast %54 : vector<1x8x384xf32> to vector<8x384xf32>
    %c144 = arith.constant 144 : index
    %c0_60 = arith.constant 0 : index
    %56 = vector.load %arg4[%c144, %c0_60] : memref<288x384xf32, #tpu.memory_space<vmem>>, vector<8x384xf32>
    tpu.vector_store %arg4[%c144, %c0_60], %55 {strides = array<i32>} : memref<288x384xf32, #tpu.memory_space<vmem>>, vector<8x384xf32>,
    %c0_61 = arith.constant 0 : index
    %c0_62 = arith.constant 0 : index
    %c56_63 = arith.constant 56 : index
    %57 = vector.load %arg1[%c0_61, %c0_62, %c56_63] : memref<1x8x640xf32, #tpu.memory_space<vmem>>, vector<1x8x384xf32>
    %58 = vector.shape_cast %57 : vector<1x8x384xf32> to vector<8x384xf32>
    %c152_64 = arith.constant 152 : index
    %c0_65 = arith.constant 0 : index
    %59 = vector.load %arg4[%c152_64, %c0_65] : memref<288x384xf32, #tpu.memory_space<vmem>>, vector<8x384xf32>
    tpu.vector_store %arg4[%c152_64, %c0_65], %58 {strides = array<i32>} : memref<288x384xf32, #tpu.memory_space<vmem>>, vector<8x384xf32>,
    %c0_66 = arith.constant 0 : index
    %c0_67 = arith.constant 0 : index
    %c59 = arith.constant 59 : index
    %60 = vector.load %arg1[%c0_66, %c0_67, %c59] : memref<1x8x640xf32, #tpu.memory_space<vmem>>, vector<1x8x384xf32>
    %61 = vector.shape_cast %60 : vector<1x8x384xf32> to vector<8x384xf32>
    %c160 = arith.constant 160 : index
    %c0_68 = arith.constant 0 : index
    %62 = vector.load %arg4[%c160, %c0_68] : memref<288x384xf32, #tpu.memory_space<vmem>>, vector<8x384xf32>
    tpu.vector_store %arg4[%c160, %c0_68], %61 {strides = array<i32>} : memref<288x384xf32, #tpu.memory_space<vmem>>, vector<8x384xf32>,
    %c0_69 = arith.constant 0 : index
    %c0_70 = arith.constant 0 : index
    %c125 = arith.constant 125 : index
    %63 = vector.load %arg1[%c0_69, %c0_70, %c125] : memref<1x8x640xf32, #tpu.memory_space<vmem>>, vector<1x8x384xf32>
    %64 = vector.shape_cast %63 : vector<1x8x384xf32> to vector<8x384xf32>
    %c168 = arith.constant 168 : index
    %c0_71 = arith.constant 0 : index
    %65 = vector.load %arg4[%c168, %c0_71] : memref<288x384xf32, #tpu.memory_space<vmem>>, vector<8x384xf32>
    tpu.vector_store %arg4[%c168, %c0_71], %64 {strides = array<i32>} : memref<288x384xf32, #tpu.memory_space<vmem>>, vector<8x384xf32>,
    %c0_72 = arith.constant 0 : index
    %c0_73 = arith.constant 0 : index
    %c128_74 = arith.constant 128 : index
    %66 = vector.load %arg1[%c0_72, %c0_73, %c128_74] : memref<1x8x640xf32, #tpu.memory_space<vmem>>, vector<1x8x384xf32>
    %67 = vector.shape_cast %66 : vector<1x8x384xf32> to vector<8x384xf32>
    %c176_75 = arith.constant 176 : index
    %c0_76 = arith.constant 0 : index
    %68 = vector.load %arg4[%c176_75, %c0_76] : memref<288x384xf32, #tpu.memory_space<vmem>>, vector<8x384xf32>
    tpu.vector_store %arg4[%c176_75, %c0_76], %67 {strides = array<i32>} : memref<288x384xf32, #tpu.memory_space<vmem>>, vector<8x384xf32>,
    %c0_77 = arith.constant 0 : index
    %c0_78 = arith.constant 0 : index
    %c131 = arith.constant 131 : index
    %69 = vector.load %arg1[%c0_77, %c0_78, %c131] : memref<1x8x640xf32, #tpu.memory_space<vmem>>, vector<1x8x384xf32>
    %70 = vector.shape_cast %69 : vector<1x8x384xf32> to vector<8x384xf32>
    %c184 = arith.constant 184 : index
    %c0_79 = arith.constant 0 : index
    %71 = vector.load %arg4[%c184, %c0_79] : memref<288x384xf32, #tpu.memory_space<vmem>>, vector<8x384xf32>
    tpu.vector_store %arg4[%c184, %c0_79], %70 {strides = array<i32>} : memref<288x384xf32, #tpu.memory_space<vmem>>, vector<8x384xf32>,
    %c0_80 = arith.constant 0 : index
    %c0_81 = arith.constant 0 : index
    %c197 = arith.constant 197 : index
    %72 = vector.load %arg1[%c0_80, %c0_81, %c197] : memref<1x8x640xf32, #tpu.memory_space<vmem>>, vector<1x8x384xf32>
    %73 = vector.shape_cast %72 : vector<1x8x384xf32> to vector<8x384xf32>
    %c192 = arith.constant 192 : index
    %c0_82 = arith.constant 0 : index
    %74 = vector.load %arg4[%c192, %c0_82] : memref<288x384xf32, #tpu.memory_space<vmem>>, vector<8x384xf32>
    tpu.vector_store %arg4[%c192, %c0_82], %73 {strides = array<i32>} : memref<288x384xf32, #tpu.memory_space<vmem>>, vector<8x384xf32>,
    %c0_83 = arith.constant 0 : index
    %c0_84 = arith.constant 0 : index
    %c200 = arith.constant 200 : index
    %75 = vector.load %arg1[%c0_83, %c0_84, %c200] : memref<1x8x640xf32, #tpu.memory_space<vmem>>, vector<1x8x384xf32>
    %76 = vector.shape_cast %75 : vector<1x8x384xf32> to vector<8x384xf32>
    %c200_85 = arith.constant 200 : index
    %c0_86 = arith.constant 0 : index
    %77 = vector.load %arg4[%c200_85, %c0_86] : memref<288x384xf32, #tpu.memory_space<vmem>>, vector<8x384xf32>
    tpu.vector_store %arg4[%c200_85, %c0_86], %76 {strides = array<i32>} : memref<288x384xf32, #tpu.memory_space<vmem>>, vector<8x384xf32>,
    %c0_87 = arith.constant 0 : index
    %c0_88 = arith.constant 0 : index
    %c203 = arith.constant 203 : index
    %78 = vector.load %arg1[%c0_87, %c0_88, %c203] : memref<1x8x640xf32, #tpu.memory_space<vmem>>, vector<1x8x384xf32>
    %79 = vector.shape_cast %78 : vector<1x8x384xf32> to vector<8x384xf32>
    %c208 = arith.constant 208 : index
    %c0_89 = arith.constant 0 : index
    %80 = vector.load %arg4[%c208, %c0_89] : memref<288x384xf32, #tpu.memory_space<vmem>>, vector<8x384xf32>
    tpu.vector_store %arg4[%c208, %c0_89], %79 {strides = array<i32>} : memref<288x384xf32, #tpu.memory_space<vmem>>, vector<8x384xf32>,
    %c0_90 = arith.constant 0 : index
    %c0_91 = arith.constant 0 : index
    %c28 = arith.constant 28 : index
    %81 = vector.load %arg1[%c0_90, %c0_91, %c28] : memref<1x8x640xf32, #tpu.memory_space<vmem>>, vector<1x8x384xf32>
    %82 = vector.shape_cast %81 : vector<1x8x384xf32> to vector<8x384xf32>
    %c216 = arith.constant 216 : index
    %c0_92 = arith.constant 0 : index
    %83 = vector.load %arg4[%c216, %c0_92] : memref<288x384xf32, #tpu.memory_space<vmem>>, vector<8x384xf32>
    tpu.vector_store %arg4[%c216, %c0_92], %82 {strides = array<i32>} : memref<288x384xf32, #tpu.memory_space<vmem>>, vector<8x384xf32>,
    %c0_93 = arith.constant 0 : index
    %c0_94 = arith.constant 0 : index
    %c32_95 = arith.constant 32 : index
    %84 = vector.load %arg1[%c0_93, %c0_94, %c32_95] : memref<1x8x640xf32, #tpu.memory_space<vmem>>, vector<1x8x384xf32>
    %85 = vector.shape_cast %84 : vector<1x8x384xf32> to vector<8x384xf32>
    %c224 = arith.constant 224 : index
    %c0_96 = arith.constant 0 : index
    %86 = vector.load %arg4[%c224, %c0_96] : memref<288x384xf32, #tpu.memory_space<vmem>>, vector<8x384xf32>
    tpu.vector_store %arg4[%c224, %c0_96], %85 {strides = array<i32>} : memref<288x384xf32, #tpu.memory_space<vmem>>, vector<8x384xf32>,
    %c0_97 = arith.constant 0 : index
    %c0_98 = arith.constant 0 : index
    %c36 = arith.constant 36 : index
    %87 = vector.load %arg1[%c0_97, %c0_98, %c36] : memref<1x8x640xf32, #tpu.memory_space<vmem>>, vector<1x8x384xf32>
    %88 = vector.shape_cast %87 : vector<1x8x384xf32> to vector<8x384xf32>
    %c232 = arith.constant 232 : index
    %c0_99 = arith.constant 0 : index
    %89 = vector.load %arg4[%c232, %c0_99] : memref<288x384xf32, #tpu.memory_space<vmem>>, vector<8x384xf32>
    tpu.vector_store %arg4[%c232, %c0_99], %88 {strides = array<i32>} : memref<288x384xf32, #tpu.memory_space<vmem>>, vector<8x384xf32>,
    %c0_100 = arith.constant 0 : index
    %c0_101 = arith.constant 0 : index
    %c124 = arith.constant 124 : index
    %90 = vector.load %arg1[%c0_100, %c0_101, %c124] : memref<1x8x640xf32, #tpu.memory_space<vmem>>, vector<1x8x384xf32>
    %91 = vector.shape_cast %90 : vector<1x8x384xf32> to vector<8x384xf32>
    %c240 = arith.constant 240 : index
    %c0_102 = arith.constant 0 : index
    %92 = vector.load %arg4[%c240, %c0_102] : memref<288x384xf32, #tpu.memory_space<vmem>>, vector<8x384xf32>
    tpu.vector_store %arg4[%c240, %c0_102], %91 {strides = array<i32>} : memref<288x384xf32, #tpu.memory_space<vmem>>, vector<8x384xf32>,
    %c0_103 = arith.constant 0 : index
    %c0_104 = arith.constant 0 : index
    %c128_105 = arith.constant 128 : index
    %93 = vector.load %arg1[%c0_103, %c0_104, %c128_105] : memref<1x8x640xf32, #tpu.memory_space<vmem>>, vector<1x8x384xf32>
    %94 = vector.shape_cast %93 : vector<1x8x384xf32> to vector<8x384xf32>
    %c248 = arith.constant 248 : index
    %c0_106 = arith.constant 0 : index
    %95 = vector.load %arg4[%c248, %c0_106] : memref<288x384xf32, #tpu.memory_space<vmem>>, vector<8x384xf32>
    tpu.vector_store %arg4[%c248, %c0_106], %94 {strides = array<i32>} : memref<288x384xf32, #tpu.memory_space<vmem>>, vector<8x384xf32>,
    %c0_107 = arith.constant 0 : index
    %c0_108 = arith.constant 0 : index
    %c132 = arith.constant 132 : index
    %96 = vector.load %arg1[%c0_107, %c0_108, %c132] : memref<1x8x640xf32, #tpu.memory_space<vmem>>, vector<1x8x384xf32>
    %97 = vector.shape_cast %96 : vector<1x8x384xf32> to vector<8x384xf32>
    %c256 = arith.constant 256 : index
    %c0_109 = arith.constant 0 : index
    %98 = vector.load %arg4[%c256, %c0_109] : memref<288x384xf32, #tpu.memory_space<vmem>>, vector<8x384xf32>
    tpu.vector_store %arg4[%c256, %c0_109], %97 {strides = array<i32>} : memref<288x384xf32, #tpu.memory_space<vmem>>, vector<8x384xf32>,
    %c0_110 = arith.constant 0 : index
    %c0_111 = arith.constant 0 : index
    %c220 = arith.constant 220 : index
    %99 = vector.load %arg1[%c0_110, %c0_111, %c220] : memref<1x8x640xf32, #tpu.memory_space<vmem>>, vector<1x8x384xf32>
    %100 = vector.shape_cast %99 : vector<1x8x384xf32> to vector<8x384xf32>
    %c264 = arith.constant 264 : index
    %c0_112 = arith.constant 0 : index
    %101 = vector.load %arg4[%c264, %c0_112] : memref<288x384xf32, #tpu.memory_space<vmem>>, vector<8x384xf32>
    tpu.vector_store %arg4[%c264, %c0_112], %100 {strides = array<i32>} : memref<288x384xf32, #tpu.memory_space<vmem>>, vector<8x384xf32>,
    %c0_113 = arith.constant 0 : index
    %c0_114 = arith.constant 0 : index
    %c224_115 = arith.constant 224 : index
    %102 = vector.load %arg1[%c0_113, %c0_114, %c224_115] : memref<1x8x640xf32, #tpu.memory_space<vmem>>, vector<1x8x384xf32>
    %103 = vector.shape_cast %102 : vector<1x8x384xf32> to vector<8x384xf32>
    %c272 = arith.constant 272 : index
    %c0_116 = arith.constant 0 : index
    %104 = vector.load %arg4[%c272, %c0_116] : memref<288x384xf32, #tpu.memory_space<vmem>>, vector<8x384xf32>
    tpu.vector_store %arg4[%c272, %c0_116], %103 {strides = array<i32>} : memref<288x384xf32, #tpu.memory_space<vmem>>, vector<8x384xf32>,
    %c0_117 = arith.constant 0 : index
    %c0_118 = arith.constant 0 : index
    %c228 = arith.constant 228 : index
    %105 = vector.load %arg1[%c0_117, %c0_118, %c228] : memref<1x8x640xf32, #tpu.memory_space<vmem>>, vector<1x8x384xf32>
    %106 = vector.shape_cast %105 : vector<1x8x384xf32> to vector<8x384xf32>
    %c280 = arith.constant 280 : index
    %c0_119 = arith.constant 0 : index
    %107 = vector.load %arg4[%c280, %c0_119] : memref<288x384xf32, #tpu.memory_space<vmem>>, vector<8x384xf32>
    tpu.vector_store %arg4[%c280, %c0_119], %106 {strides = array<i32>} : memref<288x384xf32, #tpu.memory_space<vmem>>, vector<8x384xf32>,
    %c0_120 = arith.constant 0 : index
    %c0_121 = arith.constant 0 : index
    %108 = vector.load %arg2[%c0_120, %c0_121] : memref<32x288xf32, #tpu.memory_space<vmem>>, vector<32x288xf32>
    %c0_122 = arith.constant 0 : index
    %c0_123 = arith.constant 0 : index
    %109 = vector.load %arg4[%c0_122, %c0_123] : memref<288x384xf32, #tpu.memory_space<vmem>>, vector<288x384xf32>
    %cst = arith.constant dense<0.000000e+00> : vector<32x384xf32>
    %110 = tpu.matmul %108, %109, %cst {dimension_numbers = #tpu.dot_dimension_numbers<[1], [0], [0], [1], [0, 0, 1, 1], [], []>} : vector<32x288xf32>, vector<288x384xf32>, vector<32x384xf32> -> vector<32x384xf32>
    %cst_124 = arith.constant 0.000000e+00 : f32
    %111 = vector.broadcast %cst_124 : f32 to vector<32x384xf32>
    %112 = arith.cmpf ogt, %110, %111 : vector<32x384xf32>
    %cst_125 = arith.constant 0.000000e+00 : f32
    %113 = vector.broadcast %cst_125 : f32 to vector<32x384xf32>
    %114 = arith.minimumf %110, %113 : vector<32x384xf32>
    %115 = math.exp %114 : vector<32x384xf32>
    %cst_126 = arith.constant 1.000000e+00 : f32
    %116 = vector.broadcast %cst_126 : f32 to vector<32x384xf32>
    %117 = arith.subf %115, %116 : vector<32x384xf32>
    %118 = arith.select %112, %110, %117 : vector<32x384xi1>, vector<32x384xf32>
    %119 = vector.extract_strided_slice %118 {offsets = [0, 0], sizes = [8, 384], strides = [1, 1]} : vector<32x384xf32> to vector<8x384xf32>
    %120 = vector.extract_strided_slice %118 {offsets = [8, 0], sizes = [8, 384], strides = [1, 1]} : vector<32x384xf32> to vector<8x384xf32>
    %121 = arith.addf %119, %120 : vector<8x384xf32>
    %122 = vector.extract_strided_slice %118 {offsets = [16, 0], sizes = [8, 384], strides = [1, 1]} : vector<32x384xf32> to vector<8x384xf32>
    %123 = arith.addf %121, %122 : vector<8x384xf32>
    %124 = vector.extract_strided_slice %118 {offsets = [24, 0], sizes = [8, 384], strides = [1, 1]} : vector<32x384xf32> to vector<8x384xf32>
    %125 = arith.addf %123, %124 : vector<8x384xf32>
    %c0_127 = arith.constant 0 : index
    %c0_128 = arith.constant 0 : index
    %c0_129 = arith.constant 0 : index
    %126 = vector.load %arg3[%c0_127, %c0_128, %c0_129] : memref<1x8x384xf32, #tpu.memory_space<vmem>>, vector<1x8x384xf32>
    %127 = vector.shape_cast %126 : vector<1x8x384xf32> to vector<8x384xf32>
    %128 = vector.shape_cast %125 : vector<8x384xf32> to vector<1x8x384xf32>
    tpu.vector_store %arg3[%c0_127, %c0_128, %c0_129], %128 {strides = array<i32>} : memref<1x8x384xf32, #tpu.memory_space<vmem>>, vector<1x8x384xf32>,
    return
  }
  func.func @transform_0(%arg0: i32) -> (i32, i32, i32) {
    %c0_i32 = arith.constant 0 : i32
    %c0_i32_0 = arith.constant 0 : i32
    %c0_i32_1 = arith.constant 0 : i32
    return %arg0, %c0_i32, %c0_i32_0 : i32, i32, i32
  }
  func.func @transform_1(%arg0: i32) -> (i32, i32) {
    %c0_i32 = arith.constant 0 : i32
    %c0_i32_0 = arith.constant 0 : i32
    %c0_i32_1 = arith.constant 0 : i32
    return %c0_i32, %c0_i32_0 : i32, i32
  }
  func.func @transform_2(%arg0: i32) -> (i32, i32, i32) {
    %c0_i32 = arith.constant 0 : i32
    %c0_i32_0 = arith.constant 0 : i32
    %c0_i32_1 = arith.constant 0 : i32
    return %arg0, %c0_i32, %c0_i32_0 : i32, i32, i32
  }
}

</mosaic_0001>

<llo_original>
// kernel: mul.11
$region0: #{mul.11}
  %s0 = inlined_call_operand.vmem [shape: f32[4,8,9,8], index: 0, kind: input, shape index: {}]
  %s1 = inlined_call_operand.vmem [shape: f32[4,8,72], index: 1, kind: output, shape index: {}]
  %s2 = smov 3
  %v3 = vld [vmem:[%s0] ss:$16 sm:%s2]
  %s4 = smov 12
  %v5 = vld [vmem:[%s0] ss:$16 sm:%s4]
  %vm6 = vcmask 1043458
  %v7 = vsel %vm6, %v5, %v3
  %s8 = smov 48
  %v9 = vld [vmem:[%s0] ss:$16 sm:%s8]
  %vm10 = vcmask 1045508
  %v11 = vsel %vm10, %v9, %v7
  %s12 = smov 192
  %v13 = vld [vmem:[%s0] ss:$16 sm:%s12]
  %vm14 = vcmask 1047558
  %v15 = vsel %vm14, %v13, %v11
  %vm16 = vcmask 64512
  %17 = vst.msk [vmem:[%s1] sm:$0xff] %vm16, %v15
  %s18 = scalar_lea.vmem %s0, 128
  %s19 = smov 3
  %v20 = vld [vmem:[%s18] ss:$16 sm:%s19]
  %s21 = scalar_lea.vmem %s0, 128
  %s22 = smov 12
  %v23 = vld [vmem:[%s21] ss:$16 sm:%s22]
  %vm24 = vcmask 1043458
  %v25 = vsel %vm24, %v23, %v20
  %s26 = scalar_lea.vmem %s0, 128
  %s27 = smov 48
  %v28 = vld [vmem:[%s26] ss:$16 sm:%s27]
  %vm29 = vcmask 1045508
  %v30 = vsel %vm29, %v28, %v25
  %s31 = scalar_lea.vmem %s0, 128
  %s32 = smov 192
  %v33 = vld [vmem:[%s31] ss:$16 sm:%s32]
  %vm34 = vcmask 1047558
  %v35 = vsel %vm34, %v33, %v30
  %vm36 = vcmask 64512
  %s37 = scalar_lea.vmem %s1, 8
  %38 = vst.msk [vmem:[%s37] sm:$0xff] %vm36, %v35
  %s39 = scalar_lea.vmem %s0, 256
  %s40 = smov 3
  %v41 = vld [vmem:[%s39] ss:$16 sm:%s40]
  %s42 = scalar_lea.vmem %s0, 256
  %s43 = smov 12
  %v44 = vld [vmem:[%s42] ss:$16 sm:%s43]
  %vm45 = vcmask 1043458
  %v46 = vsel %vm45, %v44, %v41
  %s47 = scalar_lea.vmem %s0, 256
  %s48 = smov 48
  %v49 = vld [vmem:[%s47] ss:$16 sm:%s48]
  %vm50 = vcmask 1045508
  %v51 = vsel %vm50, %v49, %v46
  %s52 = scalar_lea.vmem %s0, 256
  %s53 = smov 192
  %v54 = vld [vmem:[%s52] ss:$16 sm:%s53]
  %vm55 = vcmask 1047558
  %v56 = vsel %vm55, %v54, %v51
  %vm57 = vcmask 64512
  %s58 = scalar_lea.vmem %s1, 16
  %59 = vst.msk [vmem:[%s58] sm:$0xff] %vm57, %v56
  %s60 = scalar_lea.vmem %s0, 384
  %s61 = smov 3
  %v62 = vld [vmem:[%s60] ss:$16 sm:%s61]
  %s63 = scalar_lea.vmem %s0, 384
  %s64 = smov 12
  %v65 = vld [vmem:[%s63] ss:$16 sm:%s64]
  %vm66 = vcmask 1043458
  %v67 = vsel %vm66, %v65, %v62
  %s68 = scalar_lea.vmem %s0, 384
  %s69 = smov 48
  %v70 = vld [vmem:[%s68] ss:$16 sm:%s69]
  %vm71 = vcmask 1045508
  %v72 = vsel %vm71, %v70, %v67
  %s73 = scalar_lea.vmem %s0, 384
  %s74 = smov 192
  %v75 = vld [vmem:[%s73] ss:$16 sm:%s74]
  %vm76 = vcmask 1047558
  %v77 = vsel %vm76, %v75, %v72
  %vm78 = vcmask 64512
  %s79 = scalar_lea.vmem %s1, 24
  %80 = vst.msk [vmem:[%s79] sm:$0xff] %vm78, %v77
  %s81 = scalar_lea.vmem %s0, 8
  %s82 = smov 3
  %v83 = vld [vmem:[%s81] ss:$16 sm:%s82]
  %s84 = scalar_lea.vmem %s0, 8
  %s85 = smov 12
  %v86 = vld [vmem:[%s84] ss:$16 sm:%s85]
  %vm87 = vcmask 1043458
  %v88 = vsel %vm87, %v86, %v83
  %s89 = scalar_lea.vmem %s0, 8
  %s90 = smov 48
  %v91 = vld [vmem:[%s89] ss:$16 sm:%s90]
  %vm92 = vcmask 1045508
  %v93 = vsel %vm92, %v91, %v88
  %s94 = scalar_lea.vmem %s0, 8
  %s95 = smov 192
  %v96 = vld [vmem:[%s94] ss:$16 sm:%s95]
  %vm97 = vcmask 1047558
  %v98 = vsel %vm97, %v96, %v93
  %99 = vrot.lane.b32.xlu0 %v98, 64
  %v100 = vpop.permute.xlu0 %99
  %vm101 = vcmask 589312
  %102 = vst.msk [vmem:[%s1] sm:$0xff] %vm101, %v100
  %s103 = scalar_lea.vmem %s0, 136
  %s104 = smov 3
  %v105 = vld [vmem:[%s103] ss:$16 sm:%s104]
  %s106 = scalar_lea.vmem %s0, 136
  %s107 = smov 12
  %v108 = vld [vmem:[%s106] ss:$16 sm:%s107]
  %vm109 = vcmask 1043458
  %v110 = vsel %vm109, %v108, %v105
  %s111 = scalar_lea.vmem %s0, 136
  %s112 = smov 48
  %v113 = vld [vmem:[%s111] ss:$16 sm:%s112]
  %vm114 = vcmask 1045508
  %v115 = vsel %vm114, %v113, %v110
  %s116 = scalar_lea.vmem %s0, 136
  %s117 = smov 192
  %v118 = vld [vmem:[%s116] ss:$16 sm:%s117]
  %vm119 = vcmask 1047558
  %v120 = vsel %vm119, %v118, %v115
  %121 = vrot.lane.b32.xlu0 %v120, 64
  %v122 = vpop.permute.xlu0 %121
  %vm123 = vcmask 589312
  %s124 = scalar_lea.vmem %s1, 8
  %125 = vst.msk [vmem:[%s124] sm:$0xff] %vm123, %v122
  %s126 = scalar_lea.vmem %s0, 264
  %s127 = smov 3
  %v128 = vld [vmem:[%s126] ss:$16 sm:%s127]
  %s129 = scalar_lea.vmem %s0, 264
  %s130 = smov 12
  %v131 = vld [vmem:[%s129] ss:$16 sm:%s130]
  %vm132 = vcmask 1043458
  %v133 = vsel %vm132, %v131, %v128
  %s134 = scalar_lea.vmem %s0, 264
  %s135 = smov 48
  %v136 = vld [vmem:[%s134] ss:$16 sm:%s135]
  %vm137 = vcmask 1045508
  %v138 = vsel %vm137, %v136, %v133
  %s139 = scalar_lea.vmem %s0, 264
  %s140 = smov 192
  %v141 = vld [vmem:[%s139] ss:$16 sm:%s140]
  %vm142 = vcmask 1047558
  %v143 = vsel %vm142, %v141, %v138
  %144 = vrot.lane.b32.xlu0 %v143, 64
  %v145 = vpop.permute.xlu0 %144
  %vm146 = vcmask 589312
  %s147 = scalar_lea.vmem %s1, 16
  %148 = vst.msk [vmem:[%s147] sm:$0xff] %vm146, %v145
  %s149 = scalar_lea.vmem %s0, 392
  %s150 = smov 3
  %v151 = vld [vmem:[%s149] ss:$16 sm:%s150]
  %s152 = scalar_lea.vmem %s0, 392
  %s153 = smov 12
  %v154 = vld [vmem:[%s152] ss:$16 sm:%s153]
  %vm155 = vcmask 1043458
  %v156 = vsel %vm155, %v154, %v151
  %s157 = scalar_lea.vmem %s0, 392
  %s158 = smov 48
  %v159 = vld [vmem:[%s157] ss:$16 sm:%s158]
  %vm160 = vcmask 1045508
  %v161 = vsel %vm160, %v159, %v156
  %s162 = scalar_lea.vmem %s0, 392
  %s163 = smov 192
  %v164 = vld [vmem:[%s162] ss:$16 sm:%s163]
  %vm165 = vcmask 1047558
  %v166 = vsel %vm165, %v164, %v161
  %167 = vrot.lane.b32.xlu0 %v166, 64
  %v168 = vpop.permute.xlu0 %167
  %vm169 = vcmask 589312
  %s170 = scalar_lea.vmem %s1, 24
  %171 = vst.msk [vmem:[%s170] sm:$0xff] %vm169, %v168
  %s172 = scalar_lea.vmem %s0, 7
  %s173 = smov 3
  %v174 = vld [vmem:[%s172] ss:$16 sm:%s173]
  %s175 = scalar_lea.vmem %s0, 7
  %s176 = smov 12
  %v177 = vld [vmem:[%s175] ss:$16 sm:%s176]
  %vm178 = vcmask 1043458
  %v179 = vsel %vm178, %v177, %v174
  %s180 = scalar_lea.vmem %s0, 7
  %s181 = smov 48
  %v182 = vld [vmem:[%s180] ss:$16 sm:%s181]
  %vm183 = vcmask 1045508
  %v184 = vsel %vm183, %v182, %v179
  %s185 = scalar_lea.vmem %s0, 7
  %s186 = smov 192
  %v187 = vld [vmem:[%s185] ss:$16 sm:%s186]
  %vm188 = vcmask 1047558
  %v189 = vsel %vm188, %v187, %v184
  %190 = vrot.lane.b32.xlu0 %v189, 56
  %v191 = vpop.permute.xlu0 %190
  %vm192 = vcmask 523712
  %193 = vst.msk [vmem:[%s1] sm:$0xff] %vm192, %v191
  %s194 = scalar_lea.vmem %s0, 135
  %s195 = smov 3
  %v196 = vld [vmem:[%s194] ss:$16 sm:%s195]
  %s197 = scalar_lea.vmem %s0, 135
  %s198 = smov 12
  %v199 = vld [vmem:[%s197] ss:$16 sm:%s198]
  %vm200 = vcmask 1043458
  %v201 = vsel %vm200, %v199, %v196
  %s202 = scalar_lea.vmem %s0, 135
  %s203 = smov 48
  %v204 = vld [vmem:[%s202] ss:$16 sm:%s203]
  %vm205 = vcmask 1045508
  %v206 = vsel %vm205, %v204, %v201
  %s207 = scalar_lea.vmem %s0, 135
  %s208 = smov 192
  %v209 = vld [vmem:[%s207] ss:$16 sm:%s208]
  %vm210 = vcmask 1047558
  %v211 = vsel %vm210, %v209, %v206
  %212 = vrot.lane.b32.xlu0 %v211, 56
  %v213 = vpop.permute.xlu0 %212
  %vm214 = vcmask 523712
  %s215 = scalar_lea.vmem %s1, 8
  %216 = vst.msk [vmem:[%s215] sm:$0xff] %vm214, %v213
  %s217 = scalar_lea.vmem %s0, 263
  %s218 = smov 3
  %v219 = vld [vmem:[%s217] ss:$16 sm:%s218]
  %s220 = scalar_lea.vmem %s0, 263
  %s221 = smov 12
  %v222 = vld [vmem:[%s220] ss:$16 sm:%s221]
  %vm223 = vcmask 1043458
  %v224 = vsel %vm223, %v222, %v219
  %s225 = scalar_lea.vmem %s0, 263
  %s226 = smov 48
  %v227 = vld [vmem:[%s225] ss:$16 sm:%s226]
  %vm228 = vcmask 1045508
  %v229 = vsel %vm228, %v227, %v224
  %s230 = scalar_lea.vmem %s0, 263
  %s231 = smov 192
  %v232 = vld [vmem:[%s230] ss:$16 sm:%s231]
  %vm233 = vcmask 1047558
  %v234 = vsel %vm233, %v232, %v229
  %235 = vrot.lane.b32.xlu0 %v234, 56
  %v236 = vpop.permute.xlu0 %235
  %vm237 = vcmask 523712
  %s238 = scalar_lea.vmem %s1, 16
  %239 = vst.msk [vmem:[%s238] sm:$0xff] %vm237, %v236
  %s240 = scalar_lea.vmem %s0, 391
  %s241 = smov 3
  %v242 = vld [vmem:[%s240] ss:$16 sm:%s241]
  %s243 = scalar_lea.vmem %s0, 391
  %s244 = smov 12
  %v245 = vld [vmem:[%s243] ss:$16 sm:%s244]
  %vm246 = vcmask 1043458
  %v247 = vsel %vm246, %v245, %v242
  %s248 = scalar_lea.vmem %s0, 391
  %s249 = smov 48
  %v250 = vld [vmem:[%s248] ss:$16 sm:%s249]
  %vm251 = vcmask 1045508
  %v252 = vsel %vm251, %v250, %v247
  %s253 = scalar_lea.vmem %s0, 391
  %s254 = smov 192
  %v255 = vld [vmem:[%s253] ss:$16 sm:%s254]
  %vm256 = vcmask 1047558
  %v257 = vsel %vm256, %v255, %v252
  %258 = vrot.lane.b32.xlu0 %v257, 56
  %v259 = vpop.permute.xlu0 %258
  %vm260 = vcmask 523712
  %s261 = scalar_lea.vmem %s1, 24
  %262 = vst.msk [vmem:[%s261] sm:$0xff] %vm260, %v259
  %s263 = scalar_lea.vmem %s0, 6
  %s264 = smov 3
  %v265 = vld [vmem:[%s263] ss:$16 sm:%s264]
  %s266 = scalar_lea.vmem %s0, 6
  %s267 = smov 12
  %v268 = vld [vmem:[%s266] ss:$16 sm:%s267]
  %vm269 = vcmask 1043458
  %v270 = vsel %vm269, %v268, %v265
  %s271 = scalar_lea.vmem %s0, 6
  %s272 = smov 48
  %v273 = vld [vmem:[%s271] ss:$16 sm:%s272]
  %vm274 = vcmask 1045508
  %v275 = vsel %vm274, %v273, %v270
  %s276 = scalar_lea.vmem %s0, 6
  %s277 = smov 192
  %v278 = vld [vmem:[%s276] ss:$16 sm:%s277]
  %vm279 = vcmask 1047558
  %v280 = vsel %vm279, %v278, %v275
  %281 = vrot.lane.b32.xlu0 %v280, 48
  %v282 = vpop.permute.xlu0 %281
  %vm283 = vcmask 458112
  %284 = vst.msk [vmem:[%s1] sm:$0xff] %vm283, %v282
  %s285 = scalar_lea.vmem %s0, 134
  %s286 = smov 3
  %v287 = vld [vmem:[%s285] ss:$16 sm:%s286]
  %s288 = scalar_lea.vmem %s0, 134
  %s289 = smov 12
  %v290 = vld [vmem:[%s288] ss:$16 sm:%s289]
  %vm291 = vcmask 1043458
  %v292 = vsel %vm291, %v290, %v287
  %s293 = scalar_lea.vmem %s0, 134
  %s294 = smov 48
  %v295 = vld [vmem:[%s293] ss:$16 sm:%s294]
  %vm296 = vcmask 1045508
  %v297 = vsel %vm296, %v295, %v292
  %s298 = scalar_lea.vmem %s0, 134
  %s299 = smov 192
  %v300 = vld [vmem:[%s298] ss:$16 sm:%s299]
  %vm301 = vcmask 1047558
  %v302 = vsel %vm301, %v300, %v297
  %303 = vrot.lane.b32.xlu0 %v302, 48
  %v304 = vpop.permute.xlu0 %303
  %vm305 = vcmask 458112
  %s306 = scalar_lea.vmem %s1, 8
  %307 = vst.msk [vmem:[%s306] sm:$0xff] %vm305, %v304
  %s308 = scalar_lea.vmem %s0, 262
  %s309 = smov 3
  %v310 = vld [vmem:[%s308] ss:$16 sm:%s309]
  %s311 = scalar_lea.vmem %s0, 262
  %s312 = smov 12
  %v313 = vld [vmem:[%s311] ss:$16 sm:%s312]
  %vm314 = vcmask 1043458
  %v315 = vsel %vm314, %v313, %v310
  %s316 = scalar_lea.vmem %s0, 262
  %s317 = smov 48
  %v318 = vld [vmem:[%s316] ss:$16 sm:%s317]
  %vm319 = vcmask 1045508
  %v320 = vsel %vm319, %v318, %v315
  %s321 = scalar_lea.vmem %s0, 262
  %s322 = smov 192
  %v323 = vld [vmem:[%s321] ss:$16 sm:%s322]
  %vm324 = vcmask 1047558
  %v325 = vsel %vm324, %v323, %v320
  %326 = vrot.lane.b32.xlu0 %v325, 48
  %v327 = vpop.permute.xlu0 %326
  %vm328 = vcmask 458112
  %s329 = scalar_lea.vmem %s1, 16
  %330 = vst.msk [vmem:[%s329] sm:$0xff] %vm328, %v327
  %s331 = scalar_lea.vmem %s0, 390
  %s332 = smov 3
  %v333 = vld [vmem:[%s331] ss:$16 sm:%s332]
  %s334 = scalar_lea.vmem %s0, 390
  %s335 = smov 12
  %v336 = vld [vmem:[%s334] ss:$16 sm:%s335]
  %vm337 = vcmask 1043458
  %v338 = vsel %vm337, %v336, %v333
  %s339 = scalar_lea.vmem %s0, 390
  %s340 = smov 48
  %v341 = vld [vmem:[%s339] ss:$16 sm:%s340]
  %vm342 = vcmask 1045508
  %v343 = vsel %vm342, %v341, %v338
  %s344 = scalar_lea.vmem %s0, 390
  %s345 = smov 192
  %v346 = vld [vmem:[%s344] ss:$16 sm:%s345]
  %vm347 = vcmask 1047558
  %v348 = vsel %vm347, %v346, %v343
  %349 = vrot.lane.b32.xlu0 %v348, 48
  %v350 = vpop.permute.xlu0 %349
  %vm351 = vcmask 458112
  %s352 = scalar_lea.vmem %s1, 24
  %353 = vst.msk [vmem:[%s352] sm:$0xff] %vm351, %v350
  %s354 = scalar_lea.vmem %s0, 5
  %s355 = smov 3
  %v356 = vld [vmem:[%s354] ss:$16 sm:%s355]
  %s357 = scalar_lea.vmem %s0, 5
  %s358 = smov 12
  %v359 = vld [vmem:[%s357] ss:$16 sm:%s358]
  %vm360 = vcmask 1043458
  %v361 = vsel %vm360, %v359, %v356
  %s362 = scalar_lea.vmem %s0, 5
  %s363 = smov 48
  %v364 = vld [vmem:[%s362] ss:$16 sm:%s363]
  %vm365 = vcmask 1045508
  %v366 = vsel %vm365, %v364, %v361
  %s367 = scalar_lea.vmem %s0, 5
  %s368 = smov 192
  %v369 = vld [vmem:[%s367] ss:$16 sm:%s368]
  %vm370 = vcmask 1047558
  %v371 = vsel %vm370, %v369, %v366
  %372 = vrot.lane.b32.xlu0 %v371, 40
  %v373 = vpop.permute.xlu0 %372
  %vm374 = vcmask 392512
  %375 = vst.msk [vmem:[%s1] sm:$0xff] %vm374, %v373
  %s376 = scalar_lea.vmem %s0, 133
  %s377 = smov 3
  %v378 = vld [vmem:[%s376] ss:$16 sm:%s377]
  %s379 = scalar_lea.vmem %s0, 133
  %s380 = smov 12
  %v381 = vld [vmem:[%s379] ss:$16 sm:%s380]
  %vm382 = vcmask 1043458
  %v383 = vsel %vm382, %v381, %v378
  %s384 = scalar_lea.vmem %s0, 133
  %s385 = smov 48
  %v386 = vld [vmem:[%s384] ss:$16 sm:%s385]
  %vm387 = vcmask 1045508
  %v388 = vsel %vm387, %v386, %v383
  %s389 = scalar_lea.vmem %s0, 133
  %s390 = smov 192
  %v391 = vld [vmem:[%s389] ss:$16 sm:%s390]
  %vm392 = vcmask 1047558
  %v393 = vsel %vm392, %v391, %v388
  %394 = vrot.lane.b32.xlu0 %v393, 40
  %v395 = vpop.permute.xlu0 %394
  %vm396 = vcmask 392512
  %s397 = scalar_lea.vmem %s1, 8
  %398 = vst.msk [vmem:[%s397] sm:$0xff] %vm396, %v395
  %s399 = scalar_lea.vmem %s0, 261
  %s400 = smov 3
  %v401 = vld [vmem:[%s399] ss:$16 sm:%s400]
  %s402 = scalar_lea.vmem %s0, 261
  %s403 = smov 12
  %v404 = vld [vmem:[%s402] ss:$16 sm:%s403]
  %vm405 = vcmask 1043458
  %v406 = vsel %vm405, %v404, %v401
  %s407 = scalar_lea.vmem %s0, 261
  %s408 = smov 48
  %v409 = vld [vmem:[%s407] ss:$16 sm:%s408]
  %vm410 = vcmask 1045508
  %v411 = vsel %vm410, %v409, %v406
  %s412 = scalar_lea.vmem %s0, 261
  %s413 = smov 192
  %v414 = vld [vmem:[%s412] ss:$16 sm:%s413]
  %vm415 = vcmask 1047558
  %v416 = vsel %vm415, %v414, %v411
  %417 = vrot.lane.b32.xlu0 %v416, 40
  %v418 = vpop.permute.xlu0 %417
  %vm419 = vcmask 392512
  %s420 = scalar_lea.vmem %s1, 16
  %421 = vst.msk [vmem:[%s420] sm:$0xff] %vm419, %v418
  %s422 = scalar_lea.vmem %s0, 389
  %s423 = smov 3
  %v424 = vld [vmem:[%s422] ss:$16 sm:%s423]
  %s425 = scalar_lea.vmem %s0, 389
  %s426 = smov 12
  %v427 = vld [vmem:[%s425] ss:$16 sm:%s426]
  %vm428 = vcmask 1043458
  %v429 = vsel %vm428, %v427, %v424
  %s430 = scalar_lea.vmem %s0, 389
  %s431 = smov 48
  %v432 = vld [vmem:[%s430] ss:$16 sm:%s431]
  %vm433 = vcmask 1045508
  %v434 = vsel %vm433, %v432, %v429
  %s435 = scalar_lea.vmem %s0, 389
  %s436 = smov 192
  %v437 = vld [vmem:[%s435] ss:$16 sm:%s436]
  %vm438 = vcmask 1047558
  %v439 = vsel %vm438, %v437, %v434
  %440 = vrot.lane.b32.xlu0 %v439, 40
  %v441 = vpop.permute.xlu0 %440
  %vm442 = vcmask 392512
  %s443 = scalar_lea.vmem %s1, 24
  %444 = vst.msk [vmem:[%s443] sm:$0xff] %vm442, %v441
  %s445 = scalar_lea.vmem %s0, 4
  %s446 = smov 3
  %v447 = vld [vmem:[%s445] ss:$16 sm:%s446]
  %s448 = scalar_lea.vmem %s0, 4
  %s449 = smov 12
  %v450 = vld [vmem:[%s448] ss:$16 sm:%s449]
  %vm451 = vcmask 1043458
  %v452 = vsel %vm451, %v450, %v447
  %s453 = scalar_lea.vmem %s0, 4
  %s454 = smov 48
  %v455 = vld [vmem:[%s453] ss:$16 sm:%s454]
  %vm456 = vcmask 1045508
  %v457 = vsel %vm456, %v455, %v452
  %s458 = scalar_lea.vmem %s0, 4
  %s459 = smov 192
  %v460 = vld [vmem:[%s458] ss:$16 sm:%s459]
  %vm461 = vcmask 1047558
  %v462 = vsel %vm461, %v460, %v457
  %463 = vrot.lane.b32.xlu0 %v462, 32
  %v464 = vpop.permute.xlu0 %463
  %vm465 = vcmask 326912
  %466 = vst.msk [vmem:[%s1] sm:$0xff] %vm465, %v464
  %s467 = scalar_lea.vmem %s0, 132
  %s468 = smov 3
  %v469 = vld [vmem:[%s467] ss:$16 sm:%s468]
  %s470 = scalar_lea.vmem %s0, 132
  %s471 = smov 12
  %v472 = vld [vmem:[%s470] ss:$16 sm:%s471]
  %vm473 = vcmask 1043458
  %v474 = vsel %vm473, %v472, %v469
  %s475 = scalar_lea.vmem %s0, 132
  %s476 = smov 48
  %v477 = vld [vmem:[%s475] ss:$16 sm:%s476]
  %vm478 = vcmask 1045508
  %v479 = vsel %vm478, %v477, %v474
  %s480 = scalar_lea.vmem %s0, 132
  %s481 = smov 192
  %v482 = vld [vmem:[%s480] ss:$16 sm:%s481]
  %vm483 = vcmask 1047558
  %v484 = vsel %vm483, %v482, %v479
  %485 = vrot.lane.b32.xlu0 %v484, 32
  %v486 = vpop.permute.xlu0 %485
  %vm487 = vcmask 326912
  %s488 = scalar_lea.vmem %s1, 8
  %489 = vst.msk [vmem:[%s488] sm:$0xff] %vm487, %v486
  %s490 = scalar_lea.vmem %s0, 260
  %s491 = smov 3
  %v492 = vld [vmem:[%s490] ss:$16 sm:%s491]
  %s493 = scalar_lea.vmem %s0, 260
  %s494 = smov 12
  %v495 = vld [vmem:[%s493] ss:$16 sm:%s494]
  %vm496 = vcmask 1043458
  %v497 = vsel %vm496, %v495, %v492
  %s498 = scalar_lea.vmem %s0, 260
  %s499 = smov 48
  %v500 = vld [vmem:[%s498] ss:$16 sm:%s499]
  %vm501 = vcmask 1045508
  %v502 = vsel %vm501, %v500, %v497
  %s503 = scalar_lea.vmem %s0, 260
  %s504 = smov 192
  %v505 = vld [vmem:[%s503] ss:$16 sm:%s504]
  %vm506 = vcmask 1047558
  %v507 = vsel %vm506, %v505, %v502
  %508 = vrot.lane.b32.xlu0 %v507, 32
  %v509 = vpop.permute.xlu0 %508
  %vm510 = vcmask 326912
  %s511 = scalar_lea.vmem %s1, 16
  %512 = vst.msk [vmem:[%s511] sm:$0xff] %vm510, %v509
  %s513 = scalar_lea.vmem %s0, 388
  %s514 = smov 3
  %v515 = vld [vmem:[%s513] ss:$16 sm:%s514]
  %s516 = scalar_lea.vmem %s0, 388
  %s517 = smov 12
  %v518 = vld [vmem:[%s516] ss:$16 sm:%s517]
  %vm519 = vcmask 1043458
  %v520 = vsel %vm519, %v518, %v515
  %s521 = scalar_lea.vmem %s0, 388
  %s522 = smov 48
  %v523 = vld [vmem:[%s521] ss:$16 sm:%s522]
  %vm524 = vcmask 1045508
  %v525 = vsel %vm524, %v523, %v520
  %s526 = scalar_lea.vmem %s0, 388
  %s527 = smov 192
  %v528 = vld [vmem:[%s526] ss:$16 sm:%s527]
  %vm529 = vcmask 1047558
  %v530 = vsel %vm529, %v528, %v525
  %531 = vrot.lane.b32.xlu0 %v530, 32
  %v532 = vpop.permute.xlu0 %531
  %vm533 = vcmask 326912
  %s534 = scalar_lea.vmem %s1, 24
  %535 = vst.msk [vmem:[%s534] sm:$0xff] %vm533, %v532
  %s536 = scalar_lea.vmem %s0, 3
  %s537 = smov 3
  %v538 = vld [vmem:[%s536] ss:$16 sm:%s537]
  %s539 = scalar_lea.vmem %s0, 3
  %s540 = smov 12
  %v541 = vld [vmem:[%s539] ss:$16 sm:%s540]
  %vm542 = vcmask 1043458
  %v543 = vsel %vm542, %v541, %v538
  %s544 = scalar_lea.vmem %s0, 3
  %s545 = smov 48
  %v546 = vld [vmem:[%s544] ss:$16 sm:%s545]
  %vm547 = vcmask 1045508
  %v548 = vsel %vm547, %v546, %v543
  %s549 = scalar_lea.vmem %s0, 3
  %s550 = smov 192
  %v551 = vld [vmem:[%s549] ss:$16 sm:%s550]
  %vm552 = vcmask 1047558
  %v553 = vsel %vm552, %v551, %v548
  %554 = vrot.lane.b32.xlu0 %v553, 24
  %v555 = vpop.permute.xlu0 %554
  %vm556 = vcmask 261312
  %557 = vst.msk [vmem:[%s1] sm:$0xff] %vm556, %v555
  %s558 = scalar_lea.vmem %s0, 131
  %s559 = smov 3
  %v560 = vld [vmem:[%s558] ss:$16 sm:%s559]
  %s561 = scalar_lea.vmem %s0, 131
  %s562 = smov 12
  %v563 = vld [vmem:[%s561] ss:$16 sm:%s562]
  %vm564 = vcmask 1043458
  %v565 = vsel %vm564, %v563, %v560
  %s566 = scalar_lea.vmem %s0, 131
  %s567 = smov 48
  %v568 = vld [vmem:[%s566] ss:$16 sm:%s567]
  %vm569 = vcmask 1045508
  %v570 = vsel %vm569, %v568, %v565
  %s571 = scalar_lea.vmem %s0, 131
  %s572 = smov 192
  %v573 = vld [vmem:[%s571] ss:$16 sm:%s572]
  %vm574 = vcmask 1047558
  %v575 = vsel %vm574, %v573, %v570
  %576 = vrot.lane.b32.xlu0 %v575, 24
  %v577 = vpop.permute.xlu0 %576
  %vm578 = vcmask 261312
  %s579 = scalar_lea.vmem %s1, 8
  %580 = vst.msk [vmem:[%s579] sm:$0xff] %vm578, %v577
  %s581 = scalar_lea.vmem %s0, 259
  %s582 = smov 3
  %v583 = vld [vmem:[%s581] ss:$16 sm:%s582]
  %s584 = scalar_lea.vmem %s0, 259
  %s585 = smov 12
  %v586 = vld [vmem:[%s584] ss:$16 sm:%s585]
  %vm587 = vcmask 1043458
  %v588 = vsel %vm587, %v586, %v583
  %s589 = scalar_lea.vmem %s0, 259
  %s590 = smov 48
  %v591 = vld [vmem:[%s589] ss:$16 sm:%s590]
  %vm592 = vcmask 1045508
  %v593 = vsel %vm592, %v591, %v588
  %s594 = scalar_lea.vmem %s0, 259
  %s595 = smov 192
  %v596 = vld [vmem:[%s594] ss:$16 sm:%s595]
  %vm597 = vcmask 1047558
  %v598 = vsel %vm597, %v596, %v593
  %599 = vrot.lane.b32.xlu0 %v598, 24
  %v600 = vpop.permute.xlu0 %599
  %vm601 = vcmask 261312
  %s602 = scalar_lea.vmem %s1, 16
  %603 = vst.msk [vmem:[%s602] sm:$0xff] %vm601, %v600
  %s604 = scalar_lea.vmem %s0, 387
  %s605 = smov 3
  %v606 = vld [vmem:[%s604] ss:$16 sm:%s605]
  %s607 = scalar_lea.vmem %s0, 387
  %s608 = smov 12
  %v609 = vld [vmem:[%s607] ss:$16 sm:%s608]
  %vm610 = vcmask 1043458
  %v611 = vsel %vm610, %v609, %v606
  %s612 = scalar_lea.vmem %s0, 387
  %s613 = smov 48
  %v614 = vld [vmem:[%s612] ss:$16 sm:%s613]
  %vm615 = vcmask 1045508
  %v616 = vsel %vm615, %v614, %v611
  %s617 = scalar_lea.vmem %s0, 387
  %s618 = smov 192
  %v619 = vld [vmem:[%s617] ss:$16 sm:%s618]
  %vm620 = vcmask 1047558
  %v621 = vsel %vm620, %v619, %v616
  %622 = vrot.lane.b32.xlu0 %v621, 24
  %v623 = vpop.permute.xlu0 %622
  %vm624 = vcmask 261312
  %s625 = scalar_lea.vmem %s1, 24
  %626 = vst.msk [vmem:[%s625] sm:$0xff] %vm624, %v623
  %s627 = scalar_lea.vmem %s0, 2
  %s628 = smov 3
  %v629 = vld [vmem:[%s627] ss:$16 sm:%s628]
  %s630 = scalar_lea.vmem %s0, 2
  %s631 = smov 12
  %v632 = vld [vmem:[%s630] ss:$16 sm:%s631]
  %vm633 = vcmask 1043458
  %v634 = vsel %vm633, %v632, %v629
  %s635 = scalar_lea.vmem %s0, 2
  %s636 = smov 48
  %v637 = vld [vmem:[%s635] ss:$16 sm:%s636]
  %vm638 = vcmask 1045508
  %v639 = vsel %vm638, %v637, %v634
  %s640 = scalar_lea.vmem %s0, 2
  %s641 = smov 192
  %v642 = vld [vmem:[%s640] ss:$16 sm:%s641]
  %vm643 = vcmask 1047558
  %v644 = vsel %vm643, %v642, %v639
  %645 = vrot.lane.b32.xlu0 %v644, 16
  %v646 = vpop.permute.xlu0 %645
  %vm647 = vcmask 195712
  %648 = vst.msk [vmem:[%s1] sm:$0xff] %vm647, %v646
  %s649 = scalar_lea.vmem %s0, 130
  %s650 = smov 3
  %v651 = vld [vmem:[%s649] ss:$16 sm:%s650]
  %s652 = scalar_lea.vmem %s0, 130
  %s653 = smov 12
  %v654 = vld [vmem:[%s652] ss:$16 sm:%s653]
  %vm655 = vcmask 1043458
  %v656 = vsel %vm655, %v654, %v651
  %s657 = scalar_lea.vmem %s0, 130
  %s658 = smov 48
  %v659 = vld [vmem:[%s657] ss:$16 sm:%s658]
  %vm660 = vcmask 1045508
  %v661 = vsel %vm660, %v659, %v656
  %s662 = scalar_lea.vmem %s0, 130
  %s663 = smov 192
  %v664 = vld [vmem:[%s662] ss:$16 sm:%s663]
  %vm665 = vcmask 1047558
  %v666 = vsel %vm665, %v664, %v661
  %667 = vrot.lane.b32.xlu0 %v666, 16
  %v668 = vpop.permute.xlu0 %667
  %vm669 = vcmask 195712
  %s670 = scalar_lea.vmem %s1, 8
  %671 = vst.msk [vmem:[%s670] sm:$0xff] %vm669, %v668
  %s672 = scalar_lea.vmem %s0, 258
  %s673 = smov 3
  %v674 = vld [vmem:[%s672] ss:$16 sm:%s673]
  %s675 = scalar_lea.vmem %s0, 258
  %s676 = smov 12
  %v677 = vld [vmem:[%s675] ss:$16 sm:%s676]
  %vm678 = vcmask 1043458
  %v679 = vsel %vm678, %v677, %v674
  %s680 = scalar_lea.vmem %s0, 258
  %s681 = smov 48
  %v682 = vld [vmem:[%s680] ss:$16 sm:%s681]
  %vm683 = vcmask 1045508
  %v684 = vsel %vm683, %v682, %v679
  %s685 = scalar_lea.vmem %s0, 258
  %s686 = smov 192
  %v687 = vld [vmem:[%s685] ss:$16 sm:%s686]
  %vm688 = vcmask 1047558
  %v689 = vsel %vm688, %v687, %v684
  %690 = vrot.lane.b32.xlu0 %v689, 16
  %v691 = vpop.permute.xlu0 %690
  %vm692 = vcmask 195712
  %s693 = scalar_lea.vmem %s1, 16
  %694 = vst.msk [vmem:[%s693] sm:$0xff] %vm692, %v691
  %s695 = scalar_lea.vmem %s0, 386
  %s696 = smov 3
  %v697 = vld [vmem:[%s695] ss:$16 sm:%s696]
  %s698 = scalar_lea.vmem %s0, 386
  %s699 = smov 12
  %v700 = vld [vmem:[%s698] ss:$16 sm:%s699]
  %vm701 = vcmask 1043458
  %v702 = vsel %vm701, %v700, %v697
  %s703 = scalar_lea.vmem %s0, 386
  %s704 = smov 48
  %v705 = vld [vmem:[%s703] ss:$16 sm:%s704]
  %vm706 = vcmask 1045508
  %v707 = vsel %vm706, %v705, %v702
  %s708 = scalar_lea.vmem %s0, 386
  %s709 = smov 192
  %v710 = vld [vmem:[%s708] ss:$16 sm:%s709]
  %vm711 = vcmask 1047558
  %v712 = vsel %vm711, %v710, %v707
  %713 = vrot.lane.b32.xlu0 %v712, 16
  %v714 = vpop.permute.xlu0 %713
  %vm715 = vcmask 195712
  %s716 = scalar_lea.vmem %s1, 24
  %717 = vst.msk [vmem:[%s716] sm:$0xff] %vm715, %v714
  %s718 = scalar_lea.vmem %s0, 1
  %s719 = smov 3
  %v720 = vld [vmem:[%s718] ss:$16 sm:%s719]
  %s721 = scalar_lea.vmem %s0, 1
  %s722 = smov 12
  %v723 = vld [vmem:[%s721] ss:$16 sm:%s722]
  %vm724 = vcmask 1043458
  %v725 = vsel %vm724, %v723, %v720
  %s726 = scalar_lea.vmem %s0, 1
  %s727 = smov 48
  %v728 = vld [vmem:[%s726] ss:$16 sm:%s727]
  %vm729 = vcmask 1045508
  %v730 = vsel %vm729, %v728, %v725
  %s731 = scalar_lea.vmem %s0, 1
  %s732 = smov 192
  %v733 = vld [vmem:[%s731] ss:$16 sm:%s732]
  %vm734 = vcmask 1047558
  %v735 = vsel %vm734, %v733, %v730
  %736 = vrot.lane.b32.xlu0 %v735, 8
  %v737 = vpop.permute.xlu0 %736
  %vm738 = vcmask 130112
  %739 = vst.msk [vmem:[%s1] sm:$0xff] %vm738, %v737
  %s740 = scalar_lea.vmem %s0, 129
  %s741 = smov 3
  %v742 = vld [vmem:[%s740] ss:$16 sm:%s741]
  %s743 = scalar_lea.vmem %s0, 129
  %s744 = smov 12
  %v745 = vld [vmem:[%s743] ss:$16 sm:%s744]
  %vm746 = vcmask 1043458
  %v747 = vsel %vm746, %v745, %v742
  %s748 = scalar_lea.vmem %s0, 129
  %s749 = smov 48
  %v750 = vld [vmem:[%s748] ss:$16 sm:%s749]
  %vm751 = vcmask 1045508
  %v752 = vsel %vm751, %v750, %v747
  %s753 = scalar_lea.vmem %s0, 129
  %s754 = smov 192
  %v755 = vld [vmem:[%s753] ss:$16 sm:%s754]
  %vm756 = vcmask 1047558
  %v757 = vsel %vm756, %v755, %v752
  %758 = vrot.lane.b32.xlu0 %v757, 8
  %v759 = vpop.permute.xlu0 %758
  %vm760 = vcmask 130112
  %s761 = scalar_lea.vmem %s1, 8
  %762 = vst.msk [vmem:[%s761] sm:$0xff] %vm760, %v759
  %s763 = scalar_lea.vmem %s0, 257
  %s764 = smov 3
  %v765 = vld [vmem:[%s763] ss:$16 sm:%s764]
  %s766 = scalar_lea.vmem %s0, 257
  %s767 = smov 12
  %v768 = vld [vmem:[%s766] ss:$16 sm:%s767]
  %vm769 = vcmask 1043458
  %v770 = vsel %vm769, %v768, %v765
  %s771 = scalar_lea.vmem %s0, 257
  %s772 = smov 48
  %v773 = vld [vmem:[%s771] ss:$16 sm:%s772]
  %vm774 = vcmask 1045508
  %v775 = vsel %vm774, %v773, %v770
  %s776 = scalar_lea.vmem %s0, 257
  %s777 = smov 192
  %v778 = vld [vmem:[%s776] ss:$16 sm:%s777]
  %vm779 = vcmask 1047558
  %v780 = vsel %vm779, %v778, %v775
  %781 = vrot.lane.b32.xlu0 %v780, 8
  %v782 = vpop.permute.xlu0 %781
  %vm783 = vcmask 130112
  %s784 = scalar_lea.vmem %s1, 16
  %785 = vst.msk [vmem:[%s784] sm:$0xff] %vm783, %v782
  %s786 = scalar_lea.vmem %s0, 385
  %s787 = smov 3
  %v788 = vld [vmem:[%s786] ss:$16 sm:%s787]
  %s789 = scalar_lea.vmem %s0, 385
  %s790 = smov 12
  %v791 = vld [vmem:[%s789] ss:$16 sm:%s790]
  %vm792 = vcmask 1043458
  %v793 = vsel %vm792, %v791, %v788
  %s794 = scalar_lea.vmem %s0, 385
  %s795 = smov 48
  %v796 = vld [vmem:[%s794] ss:$16 sm:%s795]
  %vm797 = vcmask 1045508
  %v798 = vsel %vm797, %v796, %v793
  %s799 = scalar_lea.vmem %s0, 385
  %s800 = smov 192
  %v801 = vld [vmem:[%s799] ss:$16 sm:%s800]
  %vm802 = vcmask 1047558
  %v803 = vsel %vm802, %v801, %v798
  %804 = vrot.lane.b32.xlu0 %v803, 8
  %v805 = vpop.permute.xlu0 %804
  %vm806 = vcmask 130112
  %s807 = scalar_lea.vmem %s1, 24
  %808 = vst.msk [vmem:[%s807] sm:$0xff] %vm806, %v805

// kernel: parallel_dilated_conv.1
$region0: #{parallel_dilated_conv.1}
  #allocation0 [shape = 'u32[]', space=smem, size = 0x4, offset = 0x4, fixed_abs, tag = 'smem constant byte address 0x4 - core index']
  #allocation1 [shape = 'u32[144,128]{1,0:T(1,128)}', space=vmem, size = 0x12000, scoped, tag = 'internal scratch']
  #allocation2 [shape = 'f32[288,384]{1,0:T(8,128)}', space=vmem, size = 0x6c000, scoped, tag = 'scratch operand']
  %s0 = inlined_call_operand.vmem [shape: f32[2,8,640], index: 0, kind: input, shape index: {}]
  %s1 = inlined_call_operand.vmem [shape: f32[32,288], index: 1, kind: input, shape index: {}]
  %s2 = inlined_call_operand.vmem [shape: f32[2,8,384], index: 2, kind: output, shape index: {}]
  %s3 = sld [smem:[#allocation0]]
  $region41: #{parallel_dilated_conv.1} parent=0
    _
  %s5 = ssub.s32 1, %s3
  %s6 = scalar_select 0, %s5, %s3
  loop: start=0, step=1, limit=4
  $region2: #{parallel_dilated_conv.1} parent=0 // loop_pre_header
    _
  $region3: #{parallel_dilated_conv.1} parent=0 // loop_header
    %s8 = sphi 0, %s12
    %p9 = scmp.ge.s32.totalorder %s8, 4
    %s18 = sphi 0, %s20
    %s21 = sphi 0, %s18
    %s22 = sphi 0, %s21
    %s38 = sphi 0, %s22
    %s42 = sphi 0, %s42
    %s44 = sphi 0, %s42
    %s45 = sphi 0, %s44
    %s59 = sphi 0, %s45
    %s65 = sphi 0, %s67
    %s68 = sphi 0, %s65
    %s69 = sphi 0, %s68
    %s85 = sphi 0, %s69
  $region4: #{parallel_dilated_conv.1} parent=0 // loop_header_branch
    %11 = sbr.rel (%p9) target = $region8
  $region5: #{parallel_dilated_conv.1} parent=0 // loop_body
    %s13 = ssub.s32 %s8, 1
    %s14 = ssub.s32 %s8, 2
    %s15 = sadd.s32 %s8, 1
    %s16 = ssub.s32 %s8, %s15
    %p17 = scmp.eq.s32.totalorder %s16, 0
    %s19 = sadd.s32 %s18, 1
    %s20 = scalar_select %p17, %s18, %s19
    %p23 = pneg %p17
    %p24 = scmp.eq.s32.totalorder %s8, 1
    %p25 = por %p23, %p24
    %p26 = scmp.ne.s32.totalorder %s18, %s21
    %p27 = scmp.eq.s32.totalorder %s8, 0
    %p28 = por %p26, %p27
    %p29 = scmp.ne.s32.totalorder %s18, %s21
    %p30 = scmp.eq.s32.totalorder %s13, 1
    %p31 = por %p29, %p30
    %p32 = scmp.ne.s32.totalorder %s21, %s22
    %p33 = scmp.eq.s32.totalorder %s13, 0
    %p34 = por %p32, %p33
    %p35 = scmp.ne.s32.totalorder %s21, %s22
    %p36 = scmp.eq.s32.totalorder %s14, 1
    %p37 = por %p35, %p36
    %p39 = scmp.ne.s32.totalorder %s22, %s38
    %p40 = scmp.eq.s32.totalorder %s14, 0
    %p41 = por %p39, %p40
    %s43 = sadd.s32 %s42, 1
    %p46 = scmp.eq.s32.totalorder %s8, 1
    %p47 = scmp.ne.s32.totalorder %s42, %s44
    %p48 = scmp.eq.s32.totalorder %s8, 0
    %p49 = por %p47, %p48
    %p50 = scmp.ne.s32.totalorder %s42, %s44
    %p51 = scmp.eq.s32.totalorder %s13, 1
    %p52 = por %p50, %p51
    %p53 = scmp.ne.s32.totalorder %s44, %s45
    %p54 = scmp.eq.s32.totalorder %s13, 0
    %p55 = por %p53, %p54
    %p56 = scmp.ne.s32.totalorder %s44, %s45
    %p57 = scmp.eq.s32.totalorder %s14, 1
    %p58 = por %p56, %p57
    %p60 = scmp.ne.s32.totalorder %s45, %s59
    %p61 = scmp.eq.s32.totalorder %s14, 0
    %p62 = por %p60, %p61
    %s63 = ssub.s32 %s8, %s15
    %p64 = scmp.eq.s32.totalorder %s63, 0
    %s66 = sadd.s32 %s65, 1
    %s67 = scalar_select %p64, %s65, %s66
    %p70 = pneg %p64
    %p71 = scmp.eq.s32.totalorder %s8, 1
    %p72 = por %p70, %p71
    %p73 = scmp.ne.s32.totalorder %s65, %s68
    %p74 = scmp.eq.s32.totalorder %s8, 0
    %p75 = por %p73, %p74
    %p76 = scmp.ne.s32.totalorder %s65, %s68
    %p77 = scmp.eq.s32.totalorder %s13, 1
    %p78 = por %p76, %p77
    %p79 = scmp.ne.s32.totalorder %s68, %s69
    %p80 = scmp.eq.s32.totalorder %s13, 0
    %p81 = por %p79, %p80
    %p82 = scmp.ne.s32.totalorder %s68, %s69
    %p83 = scmp.eq.s32.totalorder %s14, 1
    %p84 = por %p82, %p83
    %p86 = scmp.ne.s32.totalorder %s69, %s85
    %p87 = scmp.eq.s32.totalorder %s14, 0
    %p88 = por %p86, %p87
    %p89 = scmp.le.s32.totalorder 1, %s8
    %p90 = scmp.lt.s32.totalorder %s8, 3
    %p91 = pnand %p89, %p90
    %p92 = pneg %p91
    // Predicated region
    $region9: #{parallel_dilated_conv.1} parent=5 // pred_check
      _
    $region10: #{parallel_dilated_conv.1} parent=5 // pred_check_branch
      %94 = sbr.rel (%p91) target = $region12
    $region11: #{parallel_dilated_conv.1} parent=5 // pred_region
      %s95 = ssub.s32 %s8, 1
      // Predicated region
      $region13: #{parallel_dilated_conv.1} parent=11 // pred_check
        %p96 = pneg %p55
      $region14: #{parallel_dilated_conv.1} parent=11 // pred_check_branch
        %98 = sbr.rel (%p96) target = $region16
      $region15: #{parallel_dilated_conv.1} parent=11 // pred_region
        _
      $region16: #{parallel_dilated_conv.1} parent=11 // pred_fallthru
        _
    $region12: #{parallel_dilated_conv.1} parent=5 // pred_fallthru
      _
    %p99 = scmp.lt.s32.totalorder %s8, 2
    // Predicated region
    $region17: #{parallel_dilated_conv.1} parent=5 // pred_check
      %p100 = pneg %p99
    $region18: #{parallel_dilated_conv.1} parent=5 // pred_check_branch
      %102 = sbr.rel (%p100) target = $region20
    $region19: #{parallel_dilated_conv.1} parent=5 // pred_region
      // Predicated region
      $region21: #{parallel_dilated_conv.1} parent=19 // pred_check
        %p103 = pneg %p28
      $region22: #{parallel_dilated_conv.1} parent=19 // pred_check_branch
        %105 = sbr.rel (%p103) target = $region24
      $region23: #{parallel_dilated_conv.1} parent=19 // pred_region
        %p106 = scmp.lt.s32.totalorder %s8, 1
        %s107 = scalar_select %p106, %s8, 1
        %s108 = smul.addr %s107, 5
        %s109 = smul.addr %s108, 8
        %s110 = scalar_lea.vmem %s0, %s109
      $region24: #{parallel_dilated_conv.1} parent=19 // pred_fallthru
        _
    $region20: #{parallel_dilated_conv.1} parent=5 // pred_fallthru
      _
    %p111 = scmp.le.s32.totalorder 1, %s8
    %p112 = scmp.lt.s32.totalorder %s8, 3
    %p113 = pnand %p111, %p112
    %p114 = pneg %p113
    // Predicated region
    $region25: #{parallel_dilated_conv.1} parent=5 // pred_check
      _
    $region26: #{parallel_dilated_conv.1} parent=5 // pred_check_branch
      %116 = sbr.rel (%p113) target = $region28
    $region27: #{parallel_dilated_conv.1} parent=5 // pred_region
      %s117 = ssub.s32 %s8, 1
      %p118 = scmp.lt.s32.totalorder %s13, 1
      %s119 = scalar_select %p118, %s13, 1
      %s120 = smul.addr %s119, 5
      %s121 = smul.addr %s120, 8
      %s122 = scalar_lea.vmem %s0, %s121
      %p123 = pneg %p34
      %p124 = pneg %p31
      %p125 = pneg %p55
      %p126 = pneg %p52
      %p127 = pneg %p81
      %p128 = pneg %p78
      %p129 = scmp.lt.s32.totalorder %s13, 1
      %s130 = scalar_select %p129, %s13, 1
      %s131 = smul.addr %s130, 3
      %s132 = smul.addr %s131, 8
      %s133 = scalar_lea.vmem %s2, %s132
      %p134 = scmp.lt.s32.totalorder %s13, 1
      %s135 = scalar_select %p134, %s13, 1
      %s136 = smul.addr %s135, 5
      %s137 = smul.addr %s136, 8
      %s138 = scalar_lea.vmem %s0, %s137
      %p139 = scmp.lt.s32.totalorder %s13, 1
      %s140 = scalar_select %p139, %s13, 1
      %s141 = smul.addr %s140, 3
      %s142 = smul.addr %s141, 8
      %s143 = scalar_lea.vmem %s2, %s142
      %v144 = vld [vmem:[%s138] sm:$0xff]
      %v145 = vld [vmem:[%s138 + $0x8] sm:$0xff]
      %v146 = vld [vmem:[%s138 + $0x10] sm:$0xff]
      %v147 = vld [vmem:[%s138 + $0x18] sm:$0xff]
      %152 = vrot.lane.b32.xlu0 %v144, 25
      %v153 = vpop.permute.xlu0 %152
      %154 = vrot.lane.b32.xlu0 %v145, 25
      %v155 = vpop.permute.xlu0 %154
      %156 = vrot.lane.b32.xlu0 %v146, 25
      %v157 = vpop.permute.xlu0 %156
      %158 = vrot.lane.b32.xlu0 %v147, 25
      %v159 = vpop.permute.xlu0 %158
      %vm160 = vcmask 203776
      %v161 = vsel %vm160, %v153, %v155
      %v162 = vsel %vm160, %v155, %v157
      %v163 = vsel %vm160, %v157, %v159
      %167 = vst [vmem:[#allocation2] sm:$0xff] %v161
      %168 = vst [vmem:[#allocation2 + $0x8] sm:$0xff] %v162
      %169 = vst [vmem:[#allocation2 + $0x10] sm:$0xff] %v163
      %v170 = vld [vmem:[%s138] sm:$0xff]
      %v171 = vld [vmem:[%s138 + $0x8] sm:$0xff]
      %v172 = vld [vmem:[%s138 + $0x10] sm:$0xff]
      %v173 = vld [vmem:[%s138 + $0x18] sm:$0xff]
      %178 = vrot.lane.b32.xlu0 %v170, 24
      %v179 = vpop.permute.xlu0 %178
      %180 = vrot.lane.b32.xlu0 %v171, 24
      %v181 = vpop.permute.xlu0 %180
      %182 = vrot.lane.b32.xlu0 %v172, 24
      %v183 = vpop.permute.xlu0 %182
      %184 = vrot.lane.b32.xlu0 %v173, 24
      %v185 = vpop.permute.xlu0 %184
      %vm186 = vcmask 195584
      %v187 = vsel %vm186, %v179, %v181
      %v188 = vsel %vm186, %v181, %v183
      %v189 = vsel %vm186, %v183, %v185
      %193 = vst [vmem:[#allocation2 + $0x18] sm:$0xff] %v187
      %194 = vst [vmem:[#allocation2 + $0x20] sm:$0xff] %v188
      %195 = vst [vmem:[#allocation2 + $0x28] sm:$0xff] %v189
      %v196 = vld [vmem:[%s138] sm:$0xff]
      %v197 = vld [vmem:[%s138 + $0x8] sm:$0xff]
      %v198 = vld [vmem:[%s138 + $0x10] sm:$0xff]
      %v199 = vld [vmem:[%s138 + $0x18] sm:$0xff]
      %204 = vrot.lane.b32.xlu0 %v196, 23
      %v205 = vpop.permute.xlu0 %204
      %206 = vrot.lane.b32.xlu0 %v197, 23
      %v207 = vpop.permute.xlu0 %206
      %208 = vrot.lane.b32.xlu0 %v198, 23
      %v209 = vpop.permute.xlu0 %208
      %210 = vrot.lane.b32.xlu0 %v199, 23
      %v211 = vpop.permute.xlu0 %210
      %vm212 = vcmask 187392
      %v213 = vsel %vm212, %v205, %v207
      %v214 = vsel %vm212, %v207, %v209
      %v215 = vsel %vm212, %v209, %v211
      %219 = vst [vmem:[#allocation2 + $0x30] sm:$0xff] %v213
      %220 = vst [vmem:[#allocation2 + $0x38] sm:$0xff] %v214
      %221 = vst [vmem:[#allocation2 + $0x40] sm:$0xff] %v215
      %v222 = vld [vmem:[%s138] sm:$0xff]
      %v223 = vld [vmem:[%s138 + $0x8] sm:$0xff]
      %v224 = vld [vmem:[%s138 + $0x10] sm:$0xff]
      %v225 = vld [vmem:[%s138 + $0x18] sm:$0xff]
      %230 = vrot.lane.b32.xlu0 %v222, 1
      %v231 = vpop.permute.xlu0 %230
      %232 = vrot.lane.b32.xlu0 %v223, 1
      %v233 = vpop.permute.xlu0 %232
      %234 = vrot.lane.b32.xlu0 %v224, 1
      %v235 = vpop.permute.xlu0 %234
      %236 = vrot.lane.b32.xlu0 %v225, 1
      %v237 = vpop.permute.xlu0 %236
      %vm238 = vcmask 7168
      %v239 = vsel %vm238, %v231, %v233
      %v240 = vsel %vm238, %v233, %v235
      %v241 = vsel %vm238, %v235, %v237
      %245 = vst [vmem:[#allocation2 + $0x48] sm:$0xff] %v239
      %246 = vst [vmem:[#allocation2 + $0x50] sm:$0xff] %v240
      %247 = vst [vmem:[#allocation2 + $0x58] sm:$0xff] %v241
      %v248 = vld [vmem:[%s138 + $0x8] sm:$0xff]
      %v249 = vld [vmem:[%s138 + $0x10] sm:$0xff]
      %v250 = vld [vmem:[%s138 + $0x18] sm:$0xff]
      %251 = vst [vmem:[#allocation2 + $0x60] sm:$0xff] %v248
      %252 = vst [vmem:[#allocation2 + $0x68] sm:$0xff] %v249
      %253 = vst [vmem:[#allocation2 + $0x70] sm:$0xff] %v250
      %v254 = vld [vmem:[%s138 + $0x8] sm:$0xff]
      %v255 = vld [vmem:[%s138 + $0x10] sm:$0xff]
      %v256 = vld [vmem:[%s138 + $0x18] sm:$0xff]
      %v257 = vld [vmem:[%s138 + $0x20] sm:$0xff]
      %262 = vrot.lane.b32.xlu0 %v254, 127
      %v263 = vpop.permute.xlu0 %262
      %264 = vrot.lane.b32.xlu0 %v255, 127
      %v265 = vpop.permute.xlu0 %264
      %266 = vrot.lane.b32.xlu0 %v256, 127
      %v267 = vpop.permute.xlu0 %266
      %268 = vrot.lane.b32.xlu0 %v257, 127
      %v269 = vpop.permute.xlu0 %268
      %vm270 = vcmask 1039360
      %v271 = vsel %vm270, %v263, %v265
      %v272 = vsel %vm270, %v265, %v267
      %v273 = vsel %vm270, %v267, %v269
      %277 = vst [vmem:[#allocation2 + $0x78] sm:$0xff] %v271
      %278 = vst [vmem:[#allocation2 + $0x80] sm:$0xff] %v272
      %279 = vst [vmem:[#allocation2 + $0x88] sm:$0xff] %v273
      %v280 = vld [vmem:[%s138 + $0x8] sm:$0xff]
      %v281 = vld [vmem:[%s138 + $0x10] sm:$0xff]
      %v282 = vld [vmem:[%s138 + $0x18] sm:$0xff]
      %v283 = vld [vmem:[%s138 + $0x20] sm:$0xff]
      %288 = vrot.lane.b32.xlu0 %v280, 105
      %v289 = vpop.permute.xlu0 %288
      %290 = vrot.lane.b32.xlu0 %v281, 105
      %v291 = vpop.permute.xlu0 %290
      %292 = vrot.lane.b32.xlu0 %v282, 105
      %v293 = vpop.permute.xlu0 %292
      %294 = vrot.lane.b32.xlu0 %v283, 105
      %v295 = vpop.permute.xlu0 %294
      %vm296 = vcmask 859136
      %v297 = vsel %vm296, %v289, %v291
      %v298 = vsel %vm296, %v291, %v293
      %v299 = vsel %vm296, %v293, %v295
      %303 = vst [vmem:[#allocation2 + $0x90] sm:$0xff] %v297
      %304 = vst [vmem:[#allocation2 + $0x98] sm:$0xff] %v298
      %305 = vst [vmem:[#allocation2 + $0xa0] sm:$0xff] %v299
      %v306 = vld [vmem:[%s138 + $0x8] sm:$0xff]
      %v307 = vld [vmem:[%s138 + $0x10] sm:$0xff]
      %v308 = vld [vmem:[%s138 + $0x18] sm:$0xff]
      %v309 = vld [vmem:[%s138 + $0x20] sm:$0xff]
      %314 = vrot.lane.b32.xlu0 %v306, 104
      %v315 = vpop.permute.xlu0 %314
      %316 = vrot.lane.b32.xlu0 %v307, 104
      %v317 = vpop.permute.xlu0 %316
      %318 = vrot.lane.b32.xlu0 %v308, 104
      %v319 = vpop.permute.xlu0 %318
      %320 = vrot.lane.b32.xlu0 %v309, 104
      %v321 = vpop.permute.xlu0 %320
      %vm322 = vcmask 850944
      %v323 = vsel %vm322, %v315, %v317
      %v324 = vsel %vm322, %v317, %v319
      %v325 = vsel %vm322, %v319, %v321
      %329 = vst [vmem:[#allocation2 + $0xa8] sm:$0xff] %v323
      %330 = vst [vmem:[#allocation2 + $0xb0] sm:$0xff] %v324
      %331 = vst [vmem:[#allocation2 + $0xb8] sm:$0xff] %v325
      %v332 = vld [vmem:[%s138 + $0x8] sm:$0xff]
      %v333 = vld [vmem:[%s138 + $0x10] sm:$0xff]
      %v334 = vld [vmem:[%s138 + $0x18] sm:$0xff]
      %v335 = vld [vmem:[%s138 + $0x20] sm:$0xff]
      %340 = vrot.lane.b32.xlu0 %v332, 103
      %v341 = vpop.permute.xlu0 %340
      %342 = vrot.lane.b32.xlu0 %v333, 103
      %v343 = vpop.permute.xlu0 %342
      %344 = vrot.lane.b32.xlu0 %v334, 103
      %v345 = vpop.permute.xlu0 %344
      %346 = vrot.lane.b32.xlu0 %v335, 103
      %v347 = vpop.permute.xlu0 %346
      %vm348 = vcmask 842752
      %v349 = vsel %vm348, %v341, %v343
      %v350 = vsel %vm348, %v343, %v345
      %v351 = vsel %vm348, %v345, %v347
      %355 = vst [vmem:[#allocation2 + $0xc0] sm:$0xff] %v349
      %356 = vst [vmem:[#allocation2 + $0xc8] sm:$0xff] %v350
      %357 = vst [vmem:[#allocation2 + $0xd0] sm:$0xff] %v351
      %v358 = vld [vmem:[%s138] sm:$0xff]
      %v359 = vld [vmem:[%s138 + $0x8] sm:$0xff]
      %v360 = vld [vmem:[%s138 + $0x10] sm:$0xff]
      %v361 = vld [vmem:[%s138 + $0x18] sm:$0xff]
      %366 = vrot.lane.b32.xlu0 %v358, 50
      %v367 = vpop.permute.xlu0 %366
      %368 = vrot.lane.b32.xlu0 %v359, 50
      %v369 = vpop.permute.xlu0 %368
      %370 = vrot.lane.b32.xlu0 %v360, 50
      %v371 = vpop.permute.xlu0 %370
      %372 = vrot.lane.b32.xlu0 %v361, 50
      %v373 = vpop.permute.xlu0 %372
      %vm374 = vcmask 408576
      %v375 = vsel %vm374, %v367, %v369
      %v376 = vsel %vm374, %v369, %v371
      %v377 = vsel %vm374, %v371, %v373
      %381 = vst [vmem:[#allocation2 + $0xd8] sm:$0xff] %v375
      %382 = vst [vmem:[#allocation2 + $0xe0] sm:$0xff] %v376
      %383 = vst [vmem:[#allocation2 + $0xe8] sm:$0xff] %v377
      %v384 = vld [vmem:[%s138] sm:$0xff]
      %v385 = vld [vmem:[%s138 + $0x8] sm:$0xff]
      %v386 = vld [vmem:[%s138 + $0x10] sm:$0xff]
      %v387 = vld [vmem:[%s138 + $0x18] sm:$0xff]
      %392 = vrot.lane.b32.xlu0 %v384, 48
      %v393 = vpop.permute.xlu0 %392
      %394 = vrot.lane.b32.xlu0 %v385, 48
      %v395 = vpop.permute.xlu0 %394
      %396 = vrot.lane.b32.xlu0 %v386, 48
      %v397 = vpop.permute.xlu0 %396
      %398 = vrot.lane.b32.xlu0 %v387, 48
      %v399 = vpop.permute.xlu0 %398
      %vm400 = vcmask 392192
      %v401 = vsel %vm400, %v393, %v395
      %v402 = vsel %vm400, %v395, %v397
      %v403 = vsel %vm400, %v397, %v399
      %407 = vst [vmem:[#allocation2 + $0xf0] sm:$0xff] %v401
      %408 = vst [vmem:[#allocation2 + $0xf8] sm:$0xff] %v402
      %409 = vst [vmem:[#allocation2 + $0x100] sm:$0xff] %v403
      %v410 = vld [vmem:[%s138] sm:$0xff]
      %v411 = vld [vmem:[%s138 + $0x8] sm:$0xff]
      %v412 = vld [vmem:[%s138 + $0x10] sm:$0xff]
      %v413 = vld [vmem:[%s138 + $0x18] sm:$0xff]
      %418 = vrot.lane.b32.xlu0 %v410, 46
      %v419 = vpop.permute.xlu0 %418
      %420 = vrot.lane.b32.xlu0 %v411, 46
      %v421 = vpop.permute.xlu0 %420
      %422 = vrot.lane.b32.xlu0 %v412, 46
      %v423 = vpop.permute.xlu0 %422
      %424 = vrot.lane.b32.xlu0 %v413, 46
      %v425 = vpop.permute.xlu0 %424
      %vm426 = vcmask 375808
      %v427 = vsel %vm426, %v419, %v421
      %v428 = vsel %vm426, %v421, %v423
      %v429 = vsel %vm426, %v423, %v425
      %433 = vst [vmem:[#allocation2 + $0x108] sm:$0xff] %v427
      %434 = vst [vmem:[#allocation2 + $0x110] sm:$0xff] %v428
      %435 = vst [vmem:[#allocation2 + $0x118] sm:$0xff] %v429
      %v436 = vld [vmem:[%s138] sm:$0xff]
      %v437 = vld [vmem:[%s138 + $0x8] sm:$0xff]
      %v438 = vld [vmem:[%s138 + $0x10] sm:$0xff]
      %v439 = vld [vmem:[%s138 + $0x18] sm:$0xff]
      %444 = vrot.lane.b32.xlu0 %v436, 2
      %v445 = vpop.permute.xlu0 %444
      %446 = vrot.lane.b32.xlu0 %v437, 2
      %v447 = vpop.permute.xlu0 %446
      %448 = vrot.lane.b32.xlu0 %v438, 2
      %v449 = vpop.permute.xlu0 %448
      %450 = vrot.lane.b32.xlu0 %v439, 2
      %v451 = vpop.permute.xlu0 %450
      %vm452 = vcmask 15360
      %v453 = vsel %vm452, %v445, %v447
      %v454 = vsel %vm452, %v447, %v449
      %v455 = vsel %vm452, %v449, %v451
      %459 = vst [vmem:[#allocation2 + $0x120] sm:$0xff] %v453
      %460 = vst [vmem:[#allocation2 + $0x128] sm:$0xff] %v454
      %461 = vst [vmem:[#allocation2 + $0x130] sm:$0xff] %v455
      %v462 = vld [vmem:[%s138 + $0x8] sm:$0xff]
      %v463 = vld [vmem:[%s138 + $0x10] sm:$0xff]
      %v464 = vld [vmem:[%s138 + $0x18] sm:$0xff]
      %465 = vst [vmem:[#allocation2 + $0x138] sm:$0xff] %v462
      %466 = vst [vmem:[#allocation2 + $0x140] sm:$0xff] %v463
      %467 = vst [vmem:[#allocation2 + $0x148] sm:$0xff] %v464
      %v468 = vld [vmem:[%s138 + $0x8] sm:$0xff]
      %v469 = vld [vmem:[%s138 + $0x10] sm:$0xff]
      %v470 = vld [vmem:[%s138 + $0x18] sm:$0xff]
      %v471 = vld [vmem:[%s138 + $0x20] sm:$0xff]
      %476 = vrot.lane.b32.xlu0 %v468, 126
      %v477 = vpop.permute.xlu0 %476
      %478 = vrot.lane.b32.xlu0 %v469, 126
      %v479 = vpop.permute.xlu0 %478
      %480 = vrot.lane.b32.xlu0 %v470, 126
      %v481 = vpop.permute.xlu0 %480
      %482 = vrot.lane.b32.xlu0 %v471, 126
      %v483 = vpop.permute.xlu0 %482
      %vm484 = vcmask 1031168
      %v485 = vsel %vm484, %v477, %v479
      %v486 = vsel %vm484, %v479, %v481
      %v487 = vsel %vm484, %v481, %v483
      %491 = vst [vmem:[#allocation2 + $0x150] sm:$0xff] %v485
      %492 = vst [vmem:[#allocation2 + $0x158] sm:$0xff] %v486
      %493 = vst [vmem:[#allocation2 + $0x160] sm:$0xff] %v487
      %v494 = vld [vmem:[%s138 + $0x8] sm:$0xff]
      %v495 = vld [vmem:[%s138 + $0x10] sm:$0xff]
      %v496 = vld [vmem:[%s138 + $0x18] sm:$0xff]
      %v497 = vld [vmem:[%s138 + $0x20] sm:$0xff]
      %502 = vrot.lane.b32.xlu0 %v494, 82
      %v503 = vpop.permute.xlu0 %502
      %504 = vrot.lane.b32.xlu0 %v495, 82
      %v505 = vpop.permute.xlu0 %504
      %506 = vrot.lane.b32.xlu0 %v496, 82
      %v507 = vpop.permute.xlu0 %506
      %508 = vrot.lane.b32.xlu0 %v497, 82
      %v509 = vpop.permute.xlu0 %508
      %vm510 = vcmask 670720
      %v511 = vsel %vm510, %v503, %v505
      %v512 = vsel %vm510, %v505, %v507
      %v513 = vsel %vm510, %v507, %v509
      %517 = vst [vmem:[#allocation2 + $0x168] sm:$0xff] %v511
      %518 = vst [vmem:[#allocation2 + $0x170] sm:$0xff] %v512
      %519 = vst [vmem:[#allocation2 + $0x178] sm:$0xff] %v513
      %v520 = vld [vmem:[%s138 + $0x8] sm:$0xff]
      %v521 = vld [vmem:[%s138 + $0x10] sm:$0xff]
      %v522 = vld [vmem:[%s138 + $0x18] sm:$0xff]
      %v523 = vld [vmem:[%s138 + $0x20] sm:$0xff]
      %528 = vrot.lane.b32.xlu0 %v520, 80
      %v529 = vpop.permute.xlu0 %528
      %530 = vrot.lane.b32.xlu0 %v521, 80
      %v531 = vpop.permute.xlu0 %530
      %532 = vrot.lane.b32.xlu0 %v522, 80
      %v533 = vpop.permute.xlu0 %532
      %534 = vrot.lane.b32.xlu0 %v523, 80
      %v535 = vpop.permute.xlu0 %534
      %vm536 = vcmask 654336
      %v537 = vsel %vm536, %v529, %v531
      %v538 = vsel %vm536, %v531, %v533
      %v539 = vsel %vm536, %v533, %v535
      %543 = vst [vmem:[#allocation2 + $0x180] sm:$0xff] %v537
      %544 = vst [vmem:[#allocation2 + $0x188] sm:$0xff] %v538
      %545 = vst [vmem:[#allocation2 + $0x190] sm:$0xff] %v539
      %v546 = vld [vmem:[%s138 + $0x8] sm:$0xff]
      %v547 = vld [vmem:[%s138 + $0x10] sm:$0xff]
      %v548 = vld [vmem:[%s138 + $0x18] sm:$0xff]
      %v549 = vld [vmem:[%s138 + $0x20] sm:$0xff]
      %554 = vrot.lane.b32.xlu0 %v546, 78
      %v555 = vpop.permute.xlu0 %554
      %556 = vrot.lane.b32.xlu0 %v547, 78
      %v557 = vpop.permute.xlu0 %556
      %558 = vrot.lane.b32.xlu0 %v548, 78
      %v559 = vpop.permute.xlu0 %558
      %560 = vrot.lane.b32.xlu0 %v549, 78
      %v561 = vpop.permute.xlu0 %560
      %vm562 = vcmask 637952
      %v563 = vsel %vm562, %v555, %v557
      %v564 = vsel %vm562, %v557, %v559
      %v565 = vsel %vm562, %v559, %v561
      %569 = vst [vmem:[#allocation2 + $0x198] sm:$0xff] %v563
      %570 = vst [vmem:[#allocation2 + $0x1a0] sm:$0xff] %v564
      %571 = vst [vmem:[#allocation2 + $0x1a8] sm:$0xff] %v565
      %v572 = vld [vmem:[%s138] sm:$0xff]
      %v573 = vld [vmem:[%s138 + $0x8] sm:$0xff]
      %v574 = vld [vmem:[%s138 + $0x10] sm:$0xff]
      %v575 = vld [vmem:[%s138 + $0x18] sm:$0xff]
      %580 = vrot.lane.b32.xlu0 %v572, 75
      %v581 = vpop.permute.xlu0 %580
      %582 = vrot.lane.b32.xlu0 %v573, 75
      %v583 = vpop.permute.xlu0 %582
      %584 = vrot.lane.b32.xlu0 %v574, 75
      %v585 = vpop.permute.xlu0 %584
      %586 = vrot.lane.b32.xlu0 %v575, 75
      %v587 = vpop.permute.xlu0 %586
      %vm588 = vcmask 613376
      %v589 = vsel %vm588, %v581, %v583
      %v590 = vsel %vm588, %v583, %v585
      %v591 = vsel %vm588, %v585, %v587
      %595 = vst [vmem:[#allocation2 + $0x1b0] sm:$0xff] %v589
      %596 = vst [vmem:[#allocation2 + $0x1b8] sm:$0xff] %v590
      %597 = vst [vmem:[#allocation2 + $0x1c0] sm:$0xff] %v591
      %v598 = vld [vmem:[%s138] sm:$0xff]
      %v599 = vld [vmem:[%s138 + $0x8] sm:$0xff]
      %v600 = vld [vmem:[%s138 + $0x10] sm:$0xff]
      %v601 = vld [vmem:[%s138 + $0x18] sm:$0xff]
      %606 = vrot.lane.b32.xlu0 %v598, 72
      %v607 = vpop.permute.xlu0 %606
      %608 = vrot.lane.b32.xlu0 %v599, 72
      %v609 = vpop.permute.xlu0 %608
      %610 = vrot.lane.b32.xlu0 %v600, 72
      %v611 = vpop.permute.xlu0 %610
      %612 = vrot.lane.b32.xlu0 %v601, 72
      %v613 = vpop.permute.xlu0 %612
      %vm614 = vcmask 588800
      %v615 = vsel %vm614, %v607, %v609
      %v616 = vsel %vm614, %v609, %v611
      %v617 = vsel %vm614, %v611, %v613
      %621 = vst [vmem:[#allocation2 + $0x1c8] sm:$0xff] %v615
      %622 = vst [vmem:[#allocation2 + $0x1d0] sm:$0xff] %v616
      %623 = vst [vmem:[#allocation2 + $0x1d8] sm:$0xff] %v617
      %v624 = vld [vmem:[%s138] sm:$0xff]
      %v625 = vld [vmem:[%s138 + $0x8] sm:$0xff]
      %v626 = vld [vmem:[%s138 + $0x10] sm:$0xff]
      %v627 = vld [vmem:[%s138 + $0x18] sm:$0xff]
      %632 = vrot.lane.b32.xlu0 %v624, 69
      %v633 = vpop.permute.xlu0 %632
      %634 = vrot.lane.b32.xlu0 %v625, 69
      %v635 = vpop.permute.xlu0 %634
      %636 = vrot.lane.b32.xlu0 %v626, 69
      %v637 = vpop.permute.xlu0 %636
      %638 = vrot.lane.b32.xlu0 %v627, 69
      %v639 = vpop.permute.xlu0 %638
      %vm640 = vcmask 564224
      %v641 = vsel %vm640, %v633, %v635
      %v642 = vsel %vm640, %v635, %v637
      %v643 = vsel %vm640, %v637, %v639
      %647 = vst [vmem:[#allocation2 + $0x1e0] sm:$0xff] %v641
      %648 = vst [vmem:[#allocation2 + $0x1e8] sm:$0xff] %v642
      %649 = vst [vmem:[#allocation2 + $0x1f0] sm:$0xff] %v643
      %v650 = vld [vmem:[%s138] sm:$0xff]
      %v651 = vld [vmem:[%s138 + $0x8] sm:$0xff]
      %v652 = vld [vmem:[%s138 + $0x10] sm:$0xff]
      %v653 = vld [vmem:[%s138 + $0x18] sm:$0xff]
      %658 = vrot.lane.b32.xlu0 %v650, 3
      %v659 = vpop.permute.xlu0 %658
      %660 = vrot.lane.b32.xlu0 %v651, 3
      %v661 = vpop.permute.xlu0 %660
      %662 = vrot.lane.b32.xlu0 %v652, 3
      %v663 = vpop.permute.xlu0 %662
      %664 = vrot.lane.b32.xlu0 %v653, 3
      %v665 = vpop.permute.xlu0 %664
      %vm666 = vcmask 23552
      %v667 = vsel %vm666, %v659, %v661
      %v668 = vsel %vm666, %v661, %v663
      %v669 = vsel %vm666, %v663, %v665
      %673 = vst [vmem:[#allocation2 + $0x1f8] sm:$0xff] %v667
      %674 = vst [vmem:[#allocation2 + $0x200] sm:$0xff] %v668
      %675 = vst [vmem:[#allocation2 + $0x208] sm:$0xff] %v669
      %v676 = vld [vmem:[%s138 + $0x8] sm:$0xff]
      %v677 = vld [vmem:[%s138 + $0x10] sm:$0xff]
      %v678 = vld [vmem:[%s138 + $0x18] sm:$0xff]
      %679 = vst [vmem:[#allocation2 + $0x210] sm:$0xff] %v676
      %680 = vst [vmem:[#allocation2 + $0x218] sm:$0xff] %v677
      %681 = vst [vmem:[#allocation2 + $0x220] sm:$0xff] %v678
      %v682 = vld [vmem:[%s138 + $0x8] sm:$0xff]
      %v683 = vld [vmem:[%s138 + $0x10] sm:$0xff]
      %v684 = vld [vmem:[%s138 + $0x18] sm:$0xff]
      %v685 = vld [vmem:[%s138 + $0x20] sm:$0xff]
      %690 = vrot.lane.b32.xlu0 %v682, 125
      %v691 = vpop.permute.xlu0 %690
      %692 = vrot.lane.b32.xlu0 %v683, 125
      %v693 = vpop.permute.xlu0 %692
      %694 = vrot.lane.b32.xlu0 %v684, 125
      %v695 = vpop.permute.xlu0 %694
      %696 = vrot.lane.b32.xlu0 %v685, 125
      %v697 = vpop.permute.xlu0 %696
      %vm698 = vcmask 1022976
      %v699 = vsel %vm698, %v691, %v693
      %v700 = vsel %vm698, %v693, %v695
      %v701 = vsel %vm698, %v695, %v697
      %705 = vst [vmem:[#allocation2 + $0x228] sm:$0xff] %v699
      %706 = vst [vmem:[#allocation2 + $0x230] sm:$0xff] %v700
      %707 = vst [vmem:[#allocation2 + $0x238] sm:$0xff] %v701
      %v708 = vld [vmem:[%s138 + $0x8] sm:$0xff]
      %v709 = vld [vmem:[%s138 + $0x10] sm:$0xff]
      %v710 = vld [vmem:[%s138 + $0x18] sm:$0xff]
      %v711 = vld [vmem:[%s138 + $0x20] sm:$0xff]
      %716 = vrot.lane.b32.xlu0 %v708, 59
      %v717 = vpop.permute.xlu0 %716
      %718 = vrot.lane.b32.xlu0 %v709, 59
      %v719 = vpop.permute.xlu0 %718
      %720 = vrot.lane.b32.xlu0 %v710, 59
      %v721 = vpop.permute.xlu0 %720
      %722 = vrot.lane.b32.xlu0 %v711, 59
      %v723 = vpop.permute.xlu0 %722
      %vm724 = vcmask 482304
      %v725 = vsel %vm724, %v717, %v719
      %v726 = vsel %vm724, %v719, %v721
      %v727 = vsel %vm724, %v721, %v723
      %731 = vst [vmem:[#allocation2 + $0x240] sm:$0xff] %v725
      %732 = vst [vmem:[#allocation2 + $0x248] sm:$0xff] %v726
      %733 = vst [vmem:[#allocation2 + $0x250] sm:$0xff] %v727
      %v734 = vld [vmem:[%s138 + $0x8] sm:$0xff]
      %v735 = vld [vmem:[%s138 + $0x10] sm:$0xff]
      %v736 = vld [vmem:[%s138 + $0x18] sm:$0xff]
      %v737 = vld [vmem:[%s138 + $0x20] sm:$0xff]
      %742 = vrot.lane.b32.xlu0 %v734, 56
      %v743 = vpop.permute.xlu0 %742
      %744 = vrot.lane.b32.xlu0 %v735, 56
      %v745 = vpop.permute.xlu0 %744
      %746 = vrot.lane.b32.xlu0 %v736, 56
      %v747 = vpop.permute.xlu0 %746
      %748 = vrot.lane.b32.xlu0 %v737, 56
      %v749 = vpop.permute.xlu0 %748
      %vm750 = vcmask 457728
      %v751 = vsel %vm750, %v743, %v745
      %v752 = vsel %vm750, %v745, %v747
      %v753 = vsel %vm750, %v747, %v749
      %757 = vst [vmem:[#allocation2 + $0x258] sm:$0xff] %v751
      %758 = vst [vmem:[#allocation2 + $0x260] sm:$0xff] %v752
      %759 = vst [vmem:[#allocation2 + $0x268] sm:$0xff] %v753
      %v760 = vld [vmem:[%s138 + $0x8] sm:$0xff]
      %v761 = vld [vmem:[%s138 + $0x10] sm:$0xff]
      %v762 = vld [vmem:[%s138 + $0x18] sm:$0xff]
      %v763 = vld [vmem:[%s138 + $0x20] sm:$0xff]
      %768 = vrot.lane.b32.xlu0 %v760, 53
      %v769 = vpop.permute.xlu0 %768
      %770 = vrot.lane.b32.xlu0 %v761, 53
      %v771 = vpop.permute.xlu0 %770
      %772 = vrot.lane.b32.xlu0 %v762, 53
      %v773 = vpop.permute.xlu0 %772
      %774 = vrot.lane.b32.xlu0 %v763, 53
      %v775 = vpop.permute.xlu0 %774
      %vm776 = vcmask 433152
      %v777 = vsel %vm776, %v769, %v771
      %v778 = vsel %vm776, %v771, %v773
      %v779 = vsel %vm776, %v773, %v775
      %783 = vst [vmem:[#allocation2 + $0x270] sm:$0xff] %v777
      %784 = vst [vmem:[#allocation2 + $0x278] sm:$0xff] %v778
      %785 = vst [vmem:[#allocation2 + $0x280] sm:$0xff] %v779
      %v786 = vld [vmem:[%s138] sm:$0xff]
      %v787 = vld [vmem:[%s138 + $0x8] sm:$0xff]
      %v788 = vld [vmem:[%s138 + $0x10] sm:$0xff]
      %v789 = vld [vmem:[%s138 + $0x18] sm:$0xff]
      %794 = vrot.lane.b32.xlu0 %v786, 100
      %v795 = vpop.permute.xlu0 %794
      %796 = vrot.lane.b32.xlu0 %v787, 100
      %v797 = vpop.permute.xlu0 %796
      %798 = vrot.lane.b32.xlu0 %v788, 100
      %v799 = vpop.permute.xlu0 %798
      %800 = vrot.lane.b32.xlu0 %v789, 100
      %v801 = vpop.permute.xlu0 %800
      %vm802 = vcmask 818176
      %v803 = vsel %vm802, %v795, %v797
      %v804 = vsel %vm802, %v797, %v799
      %v805 = vsel %vm802, %v799, %v801
      %809 = vst [vmem:[#allocation2 + $0x288] sm:$0xff] %v803
      %810 = vst [vmem:[#allocation2 + $0x290] sm:$0xff] %v804
      %811 = vst [vmem:[#allocation2 + $0x298] sm:$0xff] %v805
      %v812 = vld [vmem:[%s138] sm:$0xff]
      %v813 = vld [vmem:[%s138 + $0x8] sm:$0xff]
      %v814 = vld [vmem:[%s138 + $0x10] sm:$0xff]
      %v815 = vld [vmem:[%s138 + $0x18] sm:$0xff]
      %820 = vrot.lane.b32.xlu0 %v812, 96
      %v821 = vpop.permute.xlu0 %820
      %822 = vrot.lane.b32.xlu0 %v813, 96
      %v823 = vpop.permute.xlu0 %822
      %824 = vrot.lane.b32.xlu0 %v814, 96
      %v825 = vpop.permute.xlu0 %824
      %826 = vrot.lane.b32.xlu0 %v815, 96
      %v827 = vpop.permute.xlu0 %826
      %vm828 = vcmask 785408
      %v829 = vsel %vm828, %v821, %v823
      %v830 = vsel %vm828, %v823, %v825
      %v831 = vsel %vm828, %v825, %v827
      %835 = vst [vmem:[#allocation2 + $0x2a0] sm:$0xff] %v829
      %836 = vst [vmem:[#allocation2 + $0x2a8] sm:$0xff] %v830
      %837 = vst [vmem:[#allocation2 + $0x2b0] sm:$0xff] %v831
      %v838 = vld [vmem:[%s138] sm:$0xff]
      %v839 = vld [vmem:[%s138 + $0x8] sm:$0xff]
      %v840 = vld [vmem:[%s138 + $0x10] sm:$0xff]
      %v841 = vld [vmem:[%s138 + $0x18] sm:$0xff]
      %846 = vrot.lane.b32.xlu0 %v838, 92
      %v847 = vpop.permute.xlu0 %846
      %848 = vrot.lane.b32.xlu0 %v839, 92
      %v849 = vpop.permute.xlu0 %848
      %850 = vrot.lane.b32.xlu0 %v840, 92
      %v851 = vpop.permute.xlu0 %850
      %852 = vrot.lane.b32.xlu0 %v841, 92
      %v853 = vpop.permute.xlu0 %852
      %vm854 = vcmask 752640
      %v855 = vsel %vm854, %v847, %v849
      %v856 = vsel %vm854, %v849, %v851
      %v857 = vsel %vm854, %v851, %v853
      %861 = vst [vmem:[#allocation2 + $0x2b8] sm:$0xff] %v855
      %862 = vst [vmem:[#allocation2 + $0x2c0] sm:$0xff] %v856
      %863 = vst [vmem:[#allocation2 + $0x2c8] sm:$0xff] %v857
      %v864 = vld [vmem:[%s138] sm:$0xff]
      %v865 = vld [vmem:[%s138 + $0x8] sm:$0xff]
      %v866 = vld [vmem:[%s138 + $0x10] sm:$0xff]
      %v867 = vld [vmem:[%s138 + $0x18] sm:$0xff]
      %872 = vrot.lane.b32.xlu0 %v864, 4
      %v873 = vpop.permute.xlu0 %872
      %874 = vrot.lane.b32.xlu0 %v865, 4
      %v875 = vpop.permute.xlu0 %874
      %876 = vrot.lane.b32.xlu0 %v866, 4
      %v877 = vpop.permute.xlu0 %876
      %878 = vrot.lane.b32.xlu0 %v867, 4
      %v879 = vpop.permute.xlu0 %878
      %vm880 = vcmask 31744
      %v881 = vsel %vm880, %v873, %v875
      %v882 = vsel %vm880, %v875, %v877
      %v883 = vsel %vm880, %v877, %v879
      %887 = vst [vmem:[#allocation2 + $0x2d0] sm:$0xff] %v881
      %888 = vst [vmem:[#allocation2 + $0x2d8] sm:$0xff] %v882
      %889 = vst [vmem:[#allocation2 + $0x2e0] sm:$0xff] %v883
      %v890 = vld [vmem:[%s138 + $0x8] sm:$0xff]
      %v891 = vld [vmem:[%s138 + $0x10] sm:$0xff]
      %v892 = vld [vmem:[%s138 + $0x18] sm:$0xff]
      %893 = vst [vmem:[#allocation2 + $0x2e8] sm:$0xff] %v890
      %894 = vst [vmem:[#allocation2 + $0x2f0] sm:$0xff] %v891
      %895 = vst [vmem:[#allocation2 + $0x2f8] sm:$0xff] %v892
      %v896 = vld [vmem:[%s138 + $0x8] sm:$0xff]
      %v897 = vld [vmem:[%s138 + $0x10] sm:$0xff]
      %v898 = vld [vmem:[%s138 + $0x18] sm:$0xff]
      %v899 = vld [vmem:[%s138 + $0x20] sm:$0xff]
      %904 = vrot.lane.b32.xlu0 %v896, 124
      %v905 = vpop.permute.xlu0 %904
      %906 = vrot.lane.b32.xlu0 %v897, 124
      %v907 = vpop.permute.xlu0 %906
      %908 = vrot.lane.b32.xlu0 %v898, 124
      %v909 = vpop.permute.xlu0 %908
      %910 = vrot.lane.b32.xlu0 %v899, 124
      %v911 = vpop.permute.xlu0 %910
      %vm912 = vcmask 1014784
      %v913 = vsel %vm912, %v905, %v907
      %v914 = vsel %vm912, %v907, %v909
      %v915 = vsel %vm912, %v909, %v911
      %919 = vst [vmem:[#allocation2 + $0x300] sm:$0xff] %v913
      %920 = vst [vmem:[#allocation2 + $0x308] sm:$0xff] %v914
      %921 = vst [vmem:[#allocation2 + $0x310] sm:$0xff] %v915
      %v922 = vld [vmem:[%s138 + $0x8] sm:$0xff]
      %v923 = vld [vmem:[%s138 + $0x10] sm:$0xff]
      %v924 = vld [vmem:[%s138 + $0x18] sm:$0xff]
      %v925 = vld [vmem:[%s138 + $0x20] sm:$0xff]
      %930 = vrot.lane.b32.xlu0 %v922, 36
      %v931 = vpop.permute.xlu0 %930
      %932 = vrot.lane.b32.xlu0 %v923, 36
      %v933 = vpop.permute.xlu0 %932
      %934 = vrot.lane.b32.xlu0 %v924, 36
      %v935 = vpop.permute.xlu0 %934
      %936 = vrot.lane.b32.xlu0 %v925, 36
      %v937 = vpop.permute.xlu0 %936
      %vm938 = vcmask 293888
      %v939 = vsel %vm938, %v931, %v933
      %v940 = vsel %vm938, %v933, %v935
      %v941 = vsel %vm938, %v935, %v937
      %945 = vst [vmem:[#allocation2 + $0x318] sm:$0xff] %v939
      %946 = vst [vmem:[#allocation2 + $0x320] sm:$0xff] %v940
      %947 = vst [vmem:[#allocation2 + $0x328] sm:$0xff] %v941
      %v948 = vld [vmem:[%s138 + $0x8] sm:$0xff]
      %v949 = vld [vmem:[%s138 + $0x10] sm:$0xff]
      %v950 = vld [vmem:[%s138 + $0x18] sm:$0xff]
      %v951 = vld [vmem:[%s138 + $0x20] sm:$0xff]
      %956 = vrot.lane.b32.xlu0 %v948, 32
      %v957 = vpop.permute.xlu0 %956
      %958 = vrot.lane.b32.xlu0 %v949, 32
      %v959 = vpop.permute.xlu0 %958
      %960 = vrot.lane.b32.xlu0 %v950, 32
      %v961 = vpop.permute.xlu0 %960
      %962 = vrot.lane.b32.xlu0 %v951, 32
      %v963 = vpop.permute.xlu0 %962
      %vm964 = vcmask 261120
      %v965 = vsel %vm964, %v957, %v959
      %v966 = vsel %vm964, %v959, %v961
      %v967 = vsel %vm964, %v961, %v963
      %971 = vst [vmem:[#allocation2 + $0x330] sm:$0xff] %v965
      %972 = vst [vmem:[#allocation2 + $0x338] sm:$0xff] %v966
      %973 = vst [vmem:[#allocation2 + $0x340] sm:$0xff] %v967
      %v974 = vld [vmem:[%s138 + $0x8] sm:$0xff]
      %v975 = vld [vmem:[%s138 + $0x10] sm:$0xff]
      %v976 = vld [vmem:[%s138 + $0x18] sm:$0xff]
      %v977 = vld [vmem:[%s138 + $0x20] sm:$0xff]
      %982 = vrot.lane.b32.xlu0 %v974, 28
      %v983 = vpop.permute.xlu0 %982
      %984 = vrot.lane.b32.xlu0 %v975, 28
      %v985 = vpop.permute.xlu0 %984
      %986 = vrot.lane.b32.xlu0 %v976, 28
      %v987 = vpop.permute.xlu0 %986
      %988 = vrot.lane.b32.xlu0 %v977, 28
      %v989 = vpop.permute.xlu0 %988
      %vm990 = vcmask 228352
      %v991 = vsel %vm990, %v983, %v985
      %v992 = vsel %vm990, %v985, %v987
      %v993 = vsel %vm990, %v987, %v989
      %997 = vst [vmem:[#allocation2 + $0x348] sm:$0xff] %v991
      %998 = vst [vmem:[#allocation2 + $0x350] sm:$0xff] %v992
      %999 = vst [vmem:[#allocation2 + $0x358] sm:$0xff] %v993
      %v1000 = vld [vmem:[%s1] sm:$0xff]
      %v1001 = vld [vmem:[%s1 + $0x8] sm:$0xff]
      %v1002 = vld [vmem:[%s1 + $0x10] sm:$0xff]
      %v1003 = vld [vmem:[%s1 + $0x18] sm:$0xff]
      %v1004 = vld [vmem:[%s1 + $0x20] sm:$0xff]
      %v1005 = vld [vmem:[%s1 + $0x28] sm:$0xff]
      %v1006 = vld [vmem:[%s1 + $0x30] sm:$0xff]
      %v1007 = vld [vmem:[%s1 + $0x38] sm:$0xff]
      %v1008 = vld [vmem:[%s1 + $0x40] sm:$0xff]
      %v1009 = vld [vmem:[%s1 + $0x48] sm:$0xff]
      %v1010 = vld [vmem:[%s1 + $0x50] sm:$0xff]
      %v1011 = vld [vmem:[%s1 + $0x58] sm:$0xff]
      %v1012 = vld [vmem:[#allocation2] sm:$0xff]
      %v1013 = vld [vmem:[#allocation2 + $0x8] sm:$0xff]
      %v1014 = vld [vmem:[#allocation2 + $0x10] sm:$0xff]
      %v1015 = vld [vmem:[#allocation2 + $0x18] sm:$0xff]
      %v1016 = vld [vmem:[#allocation2 + $0x20] sm:$0xff]
      %v1017 = vld [vmem:[#allocation2 + $0x28] sm:$0xff]
      %v1018 = vld [vmem:[#allocation2 + $0x30] sm:$0xff]
      %v1019 = vld [vmem:[#allocation2 + $0x38] sm:$0xff]
      %v1020 = vld [vmem:[#allocation2 + $0x40] sm:$0xff]
      %v1021 = vld [vmem:[#allocation2 + $0x48] sm:$0xff]
      %v1022 = vld [vmem:[#allocation2 + $0x50] sm:$0xff]
      %v1023 = vld [vmem:[#allocation2 + $0x58] sm:$0xff]
      %v1024 = vld [vmem:[#allocation2 + $0x60] sm:$0xff]
      %v1025 = vld [vmem:[#allocation2 + $0x68] sm:$0xff]
      %v1026 = vld [vmem:[#allocation2 + $0x70] sm:$0xff]
      %v1027 = vld [vmem:[#allocation2 + $0x78] sm:$0xff]
      %v1028 = vld [vmem:[#allocation2 + $0x80] sm:$0xff]
      %v1029 = vld [vmem:[#allocation2 + $0x88] sm:$0xff]
      %v1030 = vld [vmem:[#allocation2 + $0x90] sm:$0xff]
      %v1031 = vld [vmem:[#allocation2 + $0x98] sm:$0xff]
      %v1032 = vld [vmem:[#allocation2 + $0xa0] sm:$0xff]
      %v1033 = vld [vmem:[#allocation2 + $0xa8] sm:$0xff]
      %v1034 = vld [vmem:[#allocation2 + $0xb0] sm:$0xff]
      %v1035 = vld [vmem:[#allocation2 + $0xb8] sm:$0xff]
      %v1036 = vld [vmem:[#allocation2 + $0xc0] sm:$0xff]
      %v1037 = vld [vmem:[#allocation2 + $0xc8] sm:$0xff]
      %v1038 = vld [vmem:[#allocation2 + $0xd0] sm:$0xff]
      %v1039 = vld [vmem:[#allocation2 + $0xd8] sm:$0xff]
      %v1040 = vld [vmem:[#allocation2 + $0xe0] sm:$0xff]
      %v1041 = vld [vmem:[#allocation2 + $0xe8] sm:$0xff]
      %v1042 = vld [vmem:[#allocation2 + $0xf0] sm:$0xff]
      %v1043 = vld [vmem:[#allocation2 + $0xf8] sm:$0xff]
      %v1044 = vld [vmem:[#allocation2 + $0x100] sm:$0xff]
      %v1045 = vld [vmem:[#allocation2 + $0x108] sm:$0xff]
      %v1046 = vld [vmem:[#allocation2 + $0x110] sm:$0xff]
      %v1047 = vld [vmem:[#allocation2 + $0x118] sm:$0xff]
      %v1048 = vld [vmem:[#allocation2 + $0x120] sm:$0xff]
      %v1049 = vld [vmem:[#allocation2 + $0x128] sm:$0xff]
      %v1050 = vld [vmem:[#allocation2 + $0x130] sm:$0xff]
      %v1051 = vld [vmem:[#allocation2 + $0x138] sm:$0xff]
      %v1052 = vld [vmem:[#allocation2 + $0x140] sm:$0xff]
      %v1053 = vld [vmem:[#allocation2 + $0x148] sm:$0xff]
      %v1054 = vld [vmem:[#allocation2 + $0x150] sm:$0xff]
      %v1055 = vld [vmem:[#allocation2 + $0x158] sm:$0xff]
      %v1056 = vld [vmem:[#allocation2 + $0x160] sm:$0xff]
      %v1057 = vld [vmem:[#allocation2 + $0x168] sm:$0xff]
      %v1058 = vld [vmem:[#allocation2 + $0x170] sm:$0xff]
      %v1059 = vld [vmem:[#allocation2 + $0x178] sm:$0xff]
      %v1060 = vld [vmem:[#allocation2 + $0x180] sm:$0xff]
      %v1061 = vld [vmem:[#allocation2 + $0x188] sm:$0xff]
      %v1062 = vld [vmem:[#allocation2 + $0x190] sm:$0xff]
      %v1063 = vld [vmem:[#allocation2 + $0x198] sm:$0xff]
      %v1064 = vld [vmem:[#allocation2 + $0x1a0] sm:$0xff]
      %v1065 = vld [vmem:[#allocation2 + $0x1a8] sm:$0xff]
      %v1066 = vld [vmem:[#allocation2 + $0x1b0] sm:$0xff]
      %v1067 = vld [vmem:[#allocation2 + $0x1b8] sm:$0xff]
      %v1068 = vld [vmem:[#allocation2 + $0x1c0] sm:$0xff]
      %v1069 = vld [vmem:[#allocation2 + $0x1c8] sm:$0xff]
      %v1070 = vld [vmem:[#allocation2 + $0x1d0] sm:$0xff]
      %v1071 = vld [vmem:[#allocation2 + $0x1d8] sm:$0xff]
      %v1072 = vld [vmem:[#allocation2 + $0x1e0] sm:$0xff]
      %v1073 = vld [vmem:[#allocation2 + $0x1e8] sm:$0xff]
      %v1074 = vld [vmem:[#allocation2 + $0x1f0] sm:$0xff]
      %v1075 = vld [vmem:[#allocation2 + $0x1f8] sm:$0xff]
      %v1076 = vld [vmem:[#allocation2 + $0x200] sm:$0xff]
      %v1077 = vld [vmem:[#allocation2 + $0x208] sm:$0xff]
      %v1078 = vld [vmem:[#allocation2 + $0x210] sm:$0xff]
      %v1079 = vld [vmem:[#allocation2 + $0x218] sm:$0xff]
      %v1080 = vld [vmem:[#allocation2 + $0x220] sm:$0xff]
      %v1081 = vld [vmem:[#allocation2 + $0x228] sm:$0xff]
      %v1082 = vld [vmem:[#allocation2 + $0x230] sm:$0xff]
      %v1083 = vld [vmem:[#allocation2 + $0x238] sm:$0xff]
      %v1084 = vld [vmem:[#allocation2 + $0x240] sm:$0xff]
      %v1085 = vld [vmem:[#allocation2 + $0x248] sm:$0xff]
      %v1086 = vld [vmem:[#allocation2 + $0x250] sm:$0xff]
      %v1087 = vld [vmem:[#allocation2 + $0x258] sm:$0xff]
      %v1088 = vld [vmem:[#allocation2 + $0x260] sm:$0xff]
      %v1089 = vld [vmem:[#allocation2 + $0x268] sm:$0xff]
      %v1090 = vld [vmem:[#allocation2 + $0x270] sm:$0xff]
      %v1091 = vld [vmem:[#allocation2 + $0x278] sm:$0xff]
      %v1092 = vld [vmem:[#allocation2 + $0x280] sm:$0xff]
      %v1093 = vld [vmem:[#allocation2 + $0x288] sm:$0xff]
      %v1094 = vld [vmem:[#allocation2 + $0x290] sm:$0xff]
      %v1095 = vld [vmem:[#allocation2 + $0x298] sm:$0xff]
      %v1096 = vld [vmem:[#allocation2 + $0x2a0] sm:$0xff]
      %v1097 = vld [vmem:[#allocation2 + $0x2a8] sm:$0xff]
      %v1098 = vld [vmem:[#allocation2 + $0x2b0] sm:$0xff]
      %v1099 = vld [vmem:[#allocation2 + $0x2b8] sm:$0xff]
      %v1100 = vld [vmem:[#allocation2 + $0x2c0] sm:$0xff]
      %v1101 = vld [vmem:[#allocation2 + $0x2c8] sm:$0xff]
      %v1102 = vld [vmem:[#allocation2 + $0x2d0] sm:$0xff]
      %v1103 = vld [vmem:[#allocation2 + $0x2d8] sm:$0xff]
      %v1104 = vld [vmem:[#allocation2 + $0x2e0] sm:$0xff]
      %v1105 = vld [vmem:[#allocation2 + $0x2e8] sm:$0xff]
      %v1106 = vld [vmem:[#allocation2 + $0x2f0] sm:$0xff]
      %v1107 = vld [vmem:[#allocation2 + $0x2f8] sm:$0xff]
      %v1108 = vld [vmem:[#allocation2 + $0x300] sm:$0xff]
      %v1109 = vld [vmem:[#allocation2 + $0x308] sm:$0xff]
      %v1110 = vld [vmem:[#allocation2 + $0x310] sm:$0xff]
      %v1111 = vld [vmem:[#allocation2 + $0x318] sm:$0xff]
      %v1112 = vld [vmem:[#allocation2 + $0x320] sm:$0xff]
      %v1113 = vld [vmem:[#allocation2 + $0x328] sm:$0xff]
      %v1114 = vld [vmem:[#allocation2 + $0x330] sm:$0xff]
      %v1115 = vld [vmem:[#allocation2 + $0x338] sm:$0xff]
      %v1116 = vld [vmem:[#allocation2 + $0x340] sm:$0xff]
      %v1117 = vld [vmem:[#allocation2 + $0x348] sm:$0xff]
      %v1118 = vld [vmem:[#allocation2 + $0x350] sm:$0xff]
      %v1119 = vld [vmem:[#allocation2 + $0x358] sm:$0xff]
      %v1121 = vsel %vm964, %v1002, 0
      %v1124 = vsel %vm964, %v1005, 0
      %v1127 = vsel %vm964, %v1008, 0
      %v1130 = vsel %vm964, %v1011, 0
      %1132 = vmatprep.subr.mxu0 %v1058
      %1133 = vmatpush1.msra.mxu0 %v1057
      %1134 = vmatprep.subr.mxu0 %v1055
      %1135 = vmatpush1.msra.mxu0 %v1054
      %1136 = vmatprep.subr.mxu0 %v1052
      %1137 = vmatpush1.msra.mxu0 %v1051
      %1138 = vmatprep.subr.mxu0 %v1049
      %1139 = vmatpush1.msra.mxu0 %v1048
      %1140 = vmatprep.subr.mxu0 %v1046
      %1141 = vmatpush1.msra.mxu0 %v1045
      %1142 = vmatprep.subr.mxu0 %v1043
      %1143 = vmatpush1.msra.mxu0 %v1042
      %1144 = vmatprep.subr.mxu0 %v1040
      %1145 = vmatpush1.msra.mxu0 %v1039
      %1146 = vmatprep.subr.mxu0 %v1037
      %1147 = vmatpush1.msra.mxu0 %v1036
      %1148 = vmatprep.subr.mxu0 %v1034
      %1149 = vmatpush1.msra.mxu0 %v1033
      %1150 = vmatprep.subr.mxu0 %v1031
      %1151 = vmatpush1.msra.mxu0 %v1030
      %1152 = vmatprep.subr.mxu0 %v1028
      %1153 = vmatpush1.msra.mxu0 %v1027
      %1154 = vmatprep.subr.mxu0 %v1025
      %1155 = vmatpush1.msra.mxu0 %v1024
      %1156 = vmatprep.subr.mxu0 %v1022
      %1157 = vmatpush1.msra.mxu0 %v1021
      %1158 = vmatprep.subr.mxu0 %v1019
      %1159 = vmatpush1.msra.mxu0 %v1018
      %1160 = vmatprep.subr.mxu0 %v1016
      %1161 = vmatpush1.msra.mxu0 %v1015
      %1162 = vmatprep.subr.mxu0 %v1013
      %1163 = vmatpush1.msra.mxu0 %v1012
      %1164 = vmatprep.subr.mxu0 %v1106
      %1165 = vmatpush2.msra.mxu0 %v1105
      %1166 = vmatprep.subr.mxu0 %v1103
      %1167 = vmatpush2.msra.mxu0 %v1102
      %1168 = vmatprep.subr.mxu0 %v1100
      %1169 = vmatpush2.msra.mxu0 %v1099
      %1170 = vmatprep.subr.mxu0 %v1097
      %1171 = vmatpush2.msra.mxu0 %v1096
      %1172 = vmatprep.subr.mxu0 %v1094
      %1173 = vmatpush2.msra.mxu0 %v1093
      %1174 = vmatprep.subr.mxu0 %v1091
      %1175 = vmatpush2.msra.mxu0 %v1090
      %1176 = vmatprep.subr.mxu0 %v1088
      %1177 = vmatpush2.msra.mxu0 %v1087
      %1178 = vmatprep.subr.mxu0 %v1085
      %1179 = vmatpush2.msra.mxu0 %v1084
      %1180 = vmatprep.subr.mxu0 %v1082
      %1181 = vmatpush2.msra.mxu0 %v1081
      %1182 = vmatprep.subr.mxu0 %v1079
      %1183 = vmatpush2.msra.mxu0 %v1078
      %1184 = vmatprep.subr.mxu0 %v1076
      %1185 = vmatpush2.msra.mxu0 %v1075
      %1186 = vmatprep.subr.mxu0 %v1073
      %1187 = vmatpush2.msra.mxu0 %v1072
      %1188 = vmatprep.subr.mxu0 %v1070
      %1189 = vmatpush2.msra.mxu0 %v1069
      %1190 = vmatprep.subr.mxu0 %v1067
      %1191 = vmatpush2.msra.mxu0 %v1066
      %1192 = vmatprep.subr.mxu0 %v1064
      %1193 = vmatpush2.msra.mxu0 %v1063
      %1194 = vmatprep.subr.mxu0 %v1061
      %1195 = vmatpush2.msra.mxu0 %v1060
      %1196 = vmatprep.mubr.f32.mxu0 %v1001
      %1197 = vmatmul.mubr.f32.gmra.mxu0 %v1000
      %v1198 = vpop.f32.mrf.mxu0
      %v1199 = vadd.f32 0.0, %v1198
      %v1200 = vpop.f32.mrf.mxu0
      %v1201 = vadd.f32 0.0, %v1200
      %1202 = vmatprep.mubr.f32.mxu0 %v1004
      %1203 = vmatmul.mubr.f32.gmra.mxu0 %v1003
      %v1204 = vpop.f32.mrf.mxu0
      %v1205 = vadd.f32 0.0, %v1204
      %v1206 = vpop.f32.mrf.mxu0
      %v1207 = vadd.f32 0.0, %v1206
      %1208 = vmatprep.mubr.f32.mxu0 %v1007
      %1209 = vmatmul.mubr.f32.gmra.mxu0 %v1006
      %v1210 = vpop.f32.mrf.mxu0
      %v1211 = vadd.f32 0.0, %v1210
      %v1212 = vpop.f32.mrf.mxu0
      %v1213 = vadd.f32 0.0, %v1212
      %1214 = vmatprep.mubr.f32.mxu0 %v1010
      %1215 = vmatmul.mubr.f32.gmra.mxu0 %v1009
      %v1216 = vpop.f32.mrf.mxu0
      %v1217 = vadd.f32 0.0, %v1216
      %v1218 = vpop.f32.mrf.mxu0
      %v1219 = vadd.f32 0.0, %v1218
      %1220 = vdwg.mxu0
      %1221 = vmatprep.subr.mxu0 0.0
      %1222 = vmatpush1.msra.mxu0 0.0
      %1223 = vmatprep.subr.mxu0 0.0
      %1224 = vmatpush1.msra.mxu0 0.0
      %1225 = vmatprep.subr.mxu0 0.0
      %1226 = vmatpush1.msra.mxu0 0.0
      %1227 = vmatprep.subr.mxu0 0.0
      %1228 = vmatpush1.msra.mxu0 0.0
      %1229 = vmatprep.subr.mxu0 0.0
      %1230 = vmatpush1.msra.mxu0 0.0
      %1231 = vmatprep.subr.mxu0 0.0
      %1232 = vmatpush1.msra.mxu0 0.0
      %1233 = vmatprep.subr.mxu0 0.0
      %1234 = vmatpush1.msra.mxu0 0.0
      %1235 = vmatprep.subr.mxu0 0.0
      %1236 = vmatpush1.msra.mxu0 0.0
      %1237 = vmatprep.subr.mxu0 0.0
      %1238 = vmatpush1.msra.mxu0 0.0
      %1239 = vmatprep.subr.mxu0 0.0
      %1240 = vmatpush1.msra.mxu0 0.0
      %1241 = vmatprep.subr.mxu0 0.0
      %1242 = vmatpush1.msra.mxu0 0.0
      %1243 = vmatprep.subr.mxu0 0.0
      %1244 = vmatpush1.msra.mxu0 0.0
      %1245 = vmatprep.subr.mxu0 %v1118
      %1246 = vmatpush1.msra.mxu0 %v1117
      %1247 = vmatprep.subr.mxu0 %v1115
      %1248 = vmatpush1.msra.mxu0 %v1114
      %1249 = vmatprep.subr.mxu0 %v1112
      %1250 = vmatpush1.msra.mxu0 %v1111
      %1251 = vmatprep.subr.mxu0 %v1109
      %1252 = vmatpush1.msra.mxu0 %v1108
      %1253 = vmatprep.subr.mxu0 0.0
      %1254 = vmatpush2.msra.mxu0 0.0
      %1255 = vmatprep.subr.mxu0 0.0
      %1256 = vmatpush2.msra.mxu0 0.0
      %1257 = vmatprep.subr.mxu0 0.0
      %1258 = vmatpush2.msra.mxu0 0.0
      %1259 = vmatprep.subr.mxu0 0.0
      %1260 = vmatpush2.msra.mxu0 0.0
      %1261 = vmatprep.subr.mxu0 0.0
      %1262 = vmatpush2.msra.mxu0 0.0
      %1263 = vmatprep.subr.mxu0 0.0
      %1264 = vmatpush2.msra.mxu0 0.0
      %1265 = vmatprep.subr.mxu0 0.0
      %1266 = vmatpush2.msra.mxu0 0.0
      %1267 = vmatprep.subr.mxu0 0.0
      %1268 = vmatpush2.msra.mxu0 0.0
      %1269 = vmatprep.subr.mxu0 0.0
      %1270 = vmatpush2.msra.mxu0 0.0
      %1271 = vmatprep.subr.mxu0 0.0
      %1272 = vmatpush2.msra.mxu0 0.0
      %1273 = vmatprep.subr.mxu0 0.0
      %1274 = vmatpush2.msra.mxu0 0.0
      %1275 = vmatprep.subr.mxu0 0.0
      %1276 = vmatpush2.msra.mxu0 0.0
      %1277 = vmatprep.subr.mxu0 0.0
      %1278 = vmatpush2.msra.mxu0 0.0
      %1279 = vmatprep.subr.mxu0 0.0
      %1280 = vmatpush2.msra.mxu0 0.0
      %1281 = vmatprep.subr.mxu0 0.0
      %1282 = vmatpush2.msra.mxu0 0.0
      %1283 = vmatprep.subr.mxu0 0.0
      %1284 = vmatpush2.msra.mxu0 0.0
      %1285 = vmatprep.mubr.f32.mxu0 0.0
      %1286 = vmatmul.mubr.f32.gmra.mxu0 %v1121
      %v1287 = vpop.f32.mrf.mxu0
      %v1288 = vadd.f32 %v1199, %v1287
      %v1289 = vpop.f32.mrf.mxu0
      %v1290 = vadd.f32 %v1201, %v1289
      %1291 = vmatprep.mubr.f32.mxu0 0.0
      %1292 = vmatmul.mubr.f32.gmra.mxu0 %v1124
      %v1293 = vpop.f32.mrf.mxu0
      %v1294 = vadd.f32 %v1205, %v1293
      %v1295 = vpop.f32.mrf.mxu0
      %v1296 = vadd.f32 %v1207, %v1295
      %1297 = vmatprep.mubr.f32.mxu0 0.0
      %1298 = vmatmul.mubr.f32.gmra.mxu0 %v1127
      %v1299 = vpop.f32.mrf.mxu0
      %v1300 = vadd.f32 %v1211, %v1299
      %v1301 = vpop.f32.mrf.mxu0
      %v1302 = vadd.f32 %v1213, %v1301
      %1303 = vmatprep.mubr.f32.mxu0 0.0
      %1304 = vmatmul.mubr.f32.gmra.mxu0 %v1130
      %v1305 = vpop.f32.mrf.mxu0
      %v1306 = vadd.f32 %v1217, %v1305
      %v1307 = vpop.f32.mrf.mxu0
      %v1308 = vadd.f32 %v1219, %v1307
      %1309 = vdwg.mxu0
      %1310 = vmatprep.subr.mxu0 0.0
      %1311 = vmatpush1.msra.mxu0 %v1059
      %1312 = vmatprep.subr.mxu0 0.0
      %1313 = vmatpush1.msra.mxu0 %v1056
      %1314 = vmatprep.subr.mxu0 0.0
      %1315 = vmatpush1.msra.mxu0 %v1053
      %1316 = vmatprep.subr.mxu0 0.0
      %1317 = vmatpush1.msra.mxu0 %v1050
      %1318 = vmatprep.subr.mxu0 0.0
      %1319 = vmatpush1.msra.mxu0 %v1047
      %1320 = vmatprep.subr.mxu0 0.0
      %1321 = vmatpush1.msra.mxu0 %v1044
      %1322 = vmatprep.subr.mxu0 0.0
      %1323 = vmatpush1.msra.mxu0 %v1041
      %1324 = vmatprep.subr.mxu0 0.0
      %1325 = vmatpush1.msra.mxu0 %v1038
      %1326 = vmatprep.subr.mxu0 0.0
      %1327 = vmatpush1.msra.mxu0 %v1035
      %1328 = vmatprep.subr.mxu0 0.0
      %1329 = vmatpush1.msra.mxu0 %v1032
      %1330 = vmatprep.subr.mxu0 0.0
      %1331 = vmatpush1.msra.mxu0 %v1029
      %1332 = vmatprep.subr.mxu0 0.0
      %1333 = vmatpush1.msra.mxu0 %v1026
      %1334 = vmatprep.subr.mxu0 0.0
      %1335 = vmatpush1.msra.mxu0 %v1023
      %1336 = vmatprep.subr.mxu0 0.0
      %1337 = vmatpush1.msra.mxu0 %v1020
      %1338 = vmatprep.subr.mxu0 0.0
      %1339 = vmatpush1.msra.mxu0 %v1017
      %1340 = vmatprep.subr.mxu0 0.0
      %1341 = vmatpush1.msra.mxu0 %v1014
      %1342 = vmatprep.subr.mxu0 0.0
      %1343 = vmatpush2.msra.mxu0 %v1107
      %1344 = vmatprep.subr.mxu0 0.0
      %1345 = vmatpush2.msra.mxu0 %v1104
      %1346 = vmatprep.subr.mxu0 0.0
      %1347 = vmatpush2.msra.mxu0 %v1101
      %1348 = vmatprep.subr.mxu0 0.0
      %1349 = vmatpush2.msra.mxu0 %v1098
      %1350 = vmatprep.subr.mxu0 0.0
      %1351 = vmatpush2.msra.mxu0 %v1095
      %1352 = vmatprep.subr.mxu0 0.0
      %1353 = vmatpush2.msra.mxu0 %v1092
      %1354 = vmatprep.subr.mxu0 0.0
      %1355 = vmatpush2.msra.mxu0 %v1089
      %1356 = vmatprep.subr.mxu0 0.0
      %1357 = vmatpush2.msra.mxu0 %v1086
      %1358 = vmatprep.subr.mxu0 0.0
      %1359 = vmatpush2.msra.mxu0 %v1083
      %1360 = vmatprep.subr.mxu0 0.0
      %1361 = vmatpush2.msra.mxu0 %v1080
      %1362 = vmatprep.subr.mxu0 0.0
      %1363 = vmatpush2.msra.mxu0 %v1077
      %1364 = vmatprep.subr.mxu0 0.0
      %1365 = vmatpush2.msra.mxu0 %v1074
      %1366 = vmatprep.subr.mxu0 0.0
      %1367 = vmatpush2.msra.mxu0 %v1071
      %1368 = vmatprep.subr.mxu0 0.0
      %1369 = vmatpush2.msra.mxu0 %v1068
      %1370 = vmatprep.subr.mxu0 0.0
      %1371 = vmatpush2.msra.mxu0 %v1065
      %1372 = vmatprep.subr.mxu0 0.0
      %1373 = vmatpush2.msra.mxu0 %v1062
      %1374 = vmatprep.mubr.f32.mxu0 %v1001
      %1375 = vmatmul.mubr.f32.gmra.mxu0 %v1000
      %v1376 = vpop.f32.mrf.mxu0
      %v1377 = vadd.f32 0.0, %v1376
      %v1378 = vpop.f32.mrf.mxu0
      %1379 = vmatprep.mubr.f32.mxu0 %v1004
      %1380 = vmatmul.mubr.f32.gmra.mxu0 %v1003
      %v1381 = vpop.f32.mrf.mxu0
      %v1382 = vadd.f32 0.0, %v1381
      %v1383 = vpop.f32.mrf.mxu0
      %1384 = vmatprep.mubr.f32.mxu0 %v1007
      %1385 = vmatmul.mubr.f32.gmra.mxu0 %v1006
      %v1386 = vpop.f32.mrf.mxu0
      %v1387 = vadd.f32 0.0, %v1386
      %v1388 = vpop.f32.mrf.mxu0
      %1389 = vmatprep.mubr.f32.mxu0 %v1010
      %1390 = vmatmul.mubr.f32.gmra.mxu0 %v1009
      %v1391 = vpop.f32.mrf.mxu0
      %v1392 = vadd.f32 0.0, %v1391
      %v1393 = vpop.f32.mrf.mxu0
      %1394 = vdwg.mxu0
      %1395 = vmatprep.subr.mxu0 0.0
      %1396 = vmatpush1.msra.mxu0 0.0
      %1397 = vmatprep.subr.mxu0 0.0
      %1398 = vmatpush1.msra.mxu0 0.0
      %1399 = vmatprep.subr.mxu0 0.0
      %1400 = vmatpush1.msra.mxu0 0.0
      %1401 = vmatprep.subr.mxu0 0.0
      %1402 = vmatpush1.msra.mxu0 0.0
      %1403 = vmatprep.subr.mxu0 0.0
      %1404 = vmatpush1.msra.mxu0 0.0
      %1405 = vmatprep.subr.mxu0 0.0
      %1406 = vmatpush1.msra.mxu0 0.0
      %1407 = vmatprep.subr.mxu0 0.0
      %1408 = vmatpush1.msra.mxu0 0.0
      %1409 = vmatprep.subr.mxu0 0.0
      %1410 = vmatpush1.msra.mxu0 0.0
      %1411 = vmatprep.subr.mxu0 0.0
      %1412 = vmatpush1.msra.mxu0 0.0
      %1413 = vmatprep.subr.mxu0 0.0
      %1414 = vmatpush1.msra.mxu0 0.0
      %1415 = vmatprep.subr.mxu0 0.0
      %1416 = vmatpush1.msra.mxu0 0.0
      %1417 = vmatprep.subr.mxu0 0.0
      %1418 = vmatpush1.msra.mxu0 0.0
      %1419 = vmatprep.subr.mxu0 0.0
      %1420 = vmatpush1.msra.mxu0 %v1119
      %1421 = vmatprep.subr.mxu0 0.0
      %1422 = vmatpush1.msra.mxu0 %v1116
      %1423 = vmatprep.subr.mxu0 0.0
      %1424 = vmatpush1.msra.mxu0 %v1113
      %1425 = vmatprep.subr.mxu0 0.0
      %1426 = vmatpush1.msra.mxu0 %v1110
      %1427 = vmatprep.subr.mxu0 0.0
      %1428 = vmatpush2.msra.mxu0 0.0
      %1429 = vmatprep.subr.mxu0 0.0
      %1430 = vmatpush2.msra.mxu0 0.0
      %1431 = vmatprep.subr.mxu0 0.0
      %1432 = vmatpush2.msra.mxu0 0.0
      %1433 = vmatprep.subr.mxu0 0.0
      %1434 = vmatpush2.msra.mxu0 0.0
      %1435 = vmatprep.subr.mxu0 0.0
      %1436 = vmatpush2.msra.mxu0 0.0
      %1437 = vmatprep.subr.mxu0 0.0
      %1438 = vmatpush2.msra.mxu0 0.0
      %1439 = vmatprep.subr.mxu0 0.0
      %1440 = vmatpush2.msra.mxu0 0.0
      %1441 = vmatprep.subr.mxu0 0.0
      %1442 = vmatpush2.msra.mxu0 0.0
      %1443 = vmatprep.subr.mxu0 0.0
      %1444 = vmatpush2.msra.mxu0 0.0
      %1445 = vmatprep.subr.mxu0 0.0
      %1446 = vmatpush2.msra.mxu0 0.0
      %1447 = vmatprep.subr.mxu0 0.0
      %1448 = vmatpush2.msra.mxu0 0.0
      %1449 = vmatprep.subr.mxu0 0.0
      %1450 = vmatpush2.msra.mxu0 0.0
      %1451 = vmatprep.subr.mxu0 0.0
      %1452 = vmatpush2.msra.mxu0 0.0
      %1453 = vmatprep.subr.mxu0 0.0
      %1454 = vmatpush2.msra.mxu0 0.0
      %1455 = vmatprep.subr.mxu0 0.0
      %1456 = vmatpush2.msra.mxu0 0.0
      %1457 = vmatprep.subr.mxu0 0.0
      %1458 = vmatpush2.msra.mxu0 0.0
      %1459 = vmatprep.mubr.f32.mxu0 0.0
      %1460 = vmatmul.mubr.f32.gmra.mxu0 %v1121
      %v1461 = vpop.f32.mrf.mxu0
      %v1462 = vadd.f32 %v1377, %v1461
      %v1463 = vpop.f32.mrf.mxu0
      %1464 = vmatprep.mubr.f32.mxu0 0.0
      %1465 = vmatmul.mubr.f32.gmra.mxu0 %v1124
      %v1466 = vpop.f32.mrf.mxu0
      %v1467 = vadd.f32 %v1382, %v1466
      %v1468 = vpop.f32.mrf.mxu0
      %1469 = vmatprep.mubr.f32.mxu0 0.0
      %1470 = vmatmul.mubr.f32.gmra.mxu0 %v1127
      %v1471 = vpop.f32.mrf.mxu0
      %v1472 = vadd.f32 %v1387, %v1471
      %v1473 = vpop.f32.mrf.mxu0
      %1474 = vmatprep.mubr.f32.mxu0 0.0
      %1475 = vmatmul.mubr.f32.gmra.mxu0 %v1130
      %v1476 = vpop.f32.mrf.mxu0
      %v1477 = vadd.f32 %v1392, %v1476
      %v1478 = vpop.f32.mrf.mxu0
      %1479 = vdwg.mxu0
      %vm1480 = vcmp.gt.f32.partialorder %v1288, 0.0
      %vm1481 = vcmp.gt.f32.partialorder %v1290, 0.0
      %vm1482 = vcmp.gt.f32.partialorder %v1462, 0.0
      %vm1483 = vcmp.gt.f32.partialorder %v1294, 0.0
      %vm1484 = vcmp.gt.f32.partialorder %v1296, 0.0
      %vm1485 = vcmp.gt.f32.partialorder %v1467, 0.0
      %vm1486 = vcmp.gt.f32.partialorder %v1300, 0.0
      %vm1487 = vcmp.gt.f32.partialorder %v1302, 0.0
      %vm1488 = vcmp.gt.f32.partialorder %v1472, 0.0
      %vm1489 = vcmp.gt.f32.partialorder %v1306, 0.0
      %vm1490 = vcmp.gt.f32.partialorder %v1308, 0.0
      %vm1491 = vcmp.gt.f32.partialorder %v1477, 0.0
      %v1492 = vmin.f32 %v1288, 0.0
      %v1493 = vmin.f32 %v1290, 0.0
      %v1494 = vmin.f32 %v1462, 0.0
      %v1495 = vmin.f32 %v1294, 0.0
      %v1496 = vmin.f32 %v1296, 0.0
      %v1497 = vmin.f32 %v1467, 0.0
      %v1498 = vmin.f32 %v1300, 0.0
      %v1499 = vmin.f32 %v1302, 0.0
      %v1500 = vmin.f32 %v1472, 0.0
      %v1501 = vmin.f32 %v1306, 0.0
      %v1502 = vmin.f32 %v1308, 0.0
      %v1503 = vmin.f32 %v1477, 0.0
      %v1504 = vmul.f32 %v1492, 1.442695
      %v1505 = vpow.pop %v1504
      %v1506 = vmul.f32 %v1493, 1.442695
      %v1507 = vpow.pop %v1506
      %v1508 = vmul.f32 %v1494, 1.442695
      %v1509 = vpow.pop %v1508
      %v1510 = vmul.f32 %v1495, 1.442695
      %v1511 = vpow.pop %v1510
      %v1512 = vmul.f32 %v1496, 1.442695
      %v1513 = vpow.pop %v1512
      %v1514 = vmul.f32 %v1497, 1.442695
      %v1515 = vpow.pop %v1514
      %v1516 = vmul.f32 %v1498, 1.442695
      %v1517 = vpow.pop %v1516
      %v1518 = vmul.f32 %v1499, 1.442695
      %v1519 = vpow.pop %v1518
      %v1520 = vmul.f32 %v1500, 1.442695
      %v1521 = vpow.pop %v1520
      %v1522 = vmul.f32 %v1501, 1.442695
      %v1523 = vpow.pop %v1522
      %v1524 = vmul.f32 %v1502, 1.442695
      %v1525 = vpow.pop %v1524
      %v1526 = vmul.f32 %v1503, 1.442695
      %v1527 = vpow.pop %v1526
      %v1528 = vsub.f32 %v1505, 1.0
      %v1529 = vsub.f32 %v1507, 1.0
      %v1530 = vsub.f32 %v1509, 1.0
      %v1531 = vsub.f32 %v1511, 1.0
      %v1532 = vsub.f32 %v1513, 1.0
      %v1533 = vsub.f32 %v1515, 1.0
      %v1534 = vsub.f32 %v1517, 1.0
      %v1535 = vsub.f32 %v1519, 1.0
      %v1536 = vsub.f32 %v1521, 1.0
      %v1537 = vsub.f32 %v1523, 1.0
      %v1538 = vsub.f32 %v1525, 1.0
      %v1539 = vsub.f32 %v1527, 1.0
      %v1540 = vsel %vm1480, %v1288, %v1528
      %v1541 = vsel %vm1481, %v1290, %v1529
      %v1542 = vsel %vm1482, %v1462, %v1530
      %v1543 = vsel %vm1483, %v1294, %v1531
      %v1544 = vsel %vm1484, %v1296, %v1532
      %v1545 = vsel %vm1485, %v1467, %v1533
      %v1546 = vsel %vm1486, %v1300, %v1534
      %v1547 = vsel %vm1487, %v1302, %v1535
      %v1548 = vsel %vm1488, %v1472, %v1536
      %v1549 = vsel %vm1489, %v1306, %v1537
      %v1550 = vsel %vm1490, %v1308, %v1538
      %v1551 = vsel %vm1491, %v1477, %v1539
      %v1552 = vadd.f32 %v1540, %v1543
      %v1553 = vadd.f32 %v1541, %v1544
      %v1554 = vadd.f32 %v1542, %v1545
      %v1555 = vadd.f32 %v1552, %v1546
      %v1556 = vadd.f32 %v1553, %v1547
      %v1557 = vadd.f32 %v1554, %v1548
      %v1558 = vadd.f32 %v1555, %v1549
      %v1559 = vadd.f32 %v1556, %v1550
      %v1560 = vadd.f32 %v1557, %v1551
      %1561 = vst [vmem:[%s143] sm:$0xff] %v1558
      %1562 = vst [vmem:[%s143 + $0x8] sm:$0xff] %v1559
      %1563 = vst [vmem:[%s143 + $0x10] sm:$0xff] %v1560
      %p1564 = scmp.lt.s32.totalorder %s13, 1
      %s1565 = scalar_select %p1564, %s13, 1
      %s1566 = smul.addr %s1565, 3
      %s1567 = smul.addr %s1566, 8
      %s1568 = scalar_lea.vmem %s2, %s1567
      // Predicated region
      $region29: #{parallel_dilated_conv.1} parent=27 // pred_check
        %p1569 = pneg %p78
      $region30: #{parallel_dilated_conv.1} parent=27 // pred_check_branch
        %1571 = sbr.rel (%p1569) target = $region32
      $region31: #{parallel_dilated_conv.1} parent=27 // pred_region
        _
      $region32: #{parallel_dilated_conv.1} parent=27 // pred_fallthru
        _
    $region28: #{parallel_dilated_conv.1} parent=5 // pred_fallthru
      _
    %p1572 = scmp.le.s32.totalorder 2, %s8
    // Predicated region
    $region33: #{parallel_dilated_conv.1} parent=5 // pred_check
      %p1573 = pneg %p1572
    $region34: #{parallel_dilated_conv.1} parent=5 // pred_check_branch
      %1575 = sbr.rel (%p1573) target = $region36
    $region35: #{parallel_dilated_conv.1} parent=5 // pred_region
      %s1576 = ssub.s32 %s8, 2
      // Predicated region
      $region37: #{parallel_dilated_conv.1} parent=35 // pred_check
        %p1577 = pneg %p84
      $region38: #{parallel_dilated_conv.1} parent=35 // pred_check_branch
        %1579 = sbr.rel (%p1577) target = $region40
      $region39: #{parallel_dilated_conv.1} parent=35 // pred_region
        %p1580 = scmp.lt.s32.totalorder %s14, 1
        %s1581 = scalar_select %p1580, %s14, 1
        %s1582 = smul.addr %s1581, 3
        %s1583 = smul.addr %s1582, 8
        %s1584 = scalar_lea.vmem %s2, %s1583
      $region40: #{parallel_dilated_conv.1} parent=35 // pred_fallthru
        _
    $region36: #{parallel_dilated_conv.1} parent=5 // pred_fallthru
      _
  $region6: #{parallel_dilated_conv.1} parent=0 // loop_footer
    %s12 = sadd.s32 1, %s8
  $region7: #{parallel_dilated_conv.1} parent=0 // loop_footer_branch
    %7 = sbr.rel target = $region3
  $region8: #{parallel_dilated_conv.1} parent=0 // loop_exit
    _

</llo_original>
